<compile_context>
chip_gen: v5e
topology: v5e:2x2
jax: 0.10.0
libtpu: 0.0.40
codegen_flags: <defaults>
</compile_context>

<pallas_src>
import math
import jax
import jax.numpy as jnp
from jax.experimental import pallas as pl
from jax.experimental.pallas import tpu as pltpu

LANES = 128
ACC_ROWS = 64            # accumulator sublane rows (8 vregs) -> 8-way add ILP
CHUNK_ROWS = 512         # in-kernel compute chunk; bounds f32 temporaries to ~256 KiB each
MIN_KERNEL_ELEMS = 65536  # below this, a fused XLA elementwise+reduce beats the pipeline
_PAD_PRED = 1.0e4        # BCEWithLogits(1e4, 1.0) == 0 exactly in f32
_PAD_TRUE = 1.0


def _chip_config():
    """(num_tensorcores_to_shard_over, target_bytes_per_input_block)."""
    kind = ""
    try:
        dev = jax.devices()[0]
        if getattr(dev, "platform", "") == "tpu":
            kind = dev.device_kind.lower()
    except Exception:
        pass
    if ("v7" in kind) or ("tpu7" in kind):
        # 2 TCs share 3.2 TB/s HBM; 2x2x4 MiB double-buffered I/O + ~2 MiB of
        # chunk temporaries stays well under the 32 MiB scoped / 64 MiB physical VMEM.
        return 2, 4 << 20
    if "v6" in kind:
        return 1, 4 << 20        # 16 MiB double-buffered I/O < 32 MiB scoped default
    # v5e / unknown: conservative (16 MiB scoped-VMEM default, assume single TC)
    return 1, 2 << 20


def _slide_loss_kernel(scal_ref, lim_ref, pred_ref, true_ref, out_ref):
    # grid = (shard ["parallel"], tile ["arbitrary"]); the output block is
    # resident across the tile axis -> accumulator pattern.
    shard = pl.program_id(0)
    tile = pl.program_id(1)
    tiles_per_shard = pl.num_programs(1)

    @pl.when(tile == 0)
    def _():
        out_ref[...] = jnp.zeros_like(out_ref)

    tile_rows = pred_ref.shape[0]
    n_chunks = tile_rows // CHUNK_ROWS

    aiou = scal_ref[0]      # max(auto_iou, 0.2), precomputed host-side
    thresh = scal_ref[1]    # aiou - 0.1
    exp1a = scal_ref[2]     # exp(1 - aiou)
    rows_valid = lim_ref[0]  # number of real (un-masked) rows in the (rows,128) slab

    # Logical (unclamped) row offset of this block. The index_map may have
    # clamped the DMA to the last in-bounds block for fully-out-of-range grid
    # steps; masking always uses the logical position, so those contribute 0.
    block_row0 = (shard * tiles_per_shard + tile) * tile_rows

    # Hoisted once per grid step (JAX does not CSE broadcast_in_dim in loops).
    row_iota = jax.lax.broadcasted_iota(jnp.int32, (CHUNK_ROWS, LANES), 0)

    @pl.loop(0, n_chunks)
    def _(c):
        r0 = pl.multiple_of(c * CHUNK_ROWS, CHUNK_ROWS)
        valid_here = rows_valid - (block_row0 + r0)   # rows of this chunk holding real data

        @pl.when(valid_here > 0)
        def _():
            x = pred_ref[pl.ds(r0, CHUNK_ROWS), :].astype(jnp.float32)
            t = true_ref[pl.ds(r0, CHUNK_ROWS), :].astype(jnp.float32)

            # Numerically stable BCEWithLogits: max(x,0) - x*t + log1p(exp(-|x|))
            loss = jnp.maximum(x, 0.0) - x * t + jnp.log1p(jnp.exp(-jnp.abs(x)))

            w = jnp.where(t >= aiou, jnp.exp(1.0 - t),
                          jnp.where(t > thresh, exp1a, 1.0))

            wl = jnp.where(row_iota < valid_here, loss * w, 0.0)
            # Reduce only across vreg groups (pure VALU adds into 8 independent
            # accumulator vregs); lanes/sublanes stay intact.
            out_ref[...] += jnp.sum(wl.reshape(-1, ACC_ROWS, LANES), axis=0)


def _slide_loss_reference(pred, true, auto_iou=0.5, reduction="mean"):
    """Pure-JAX path mirroring the PyTorch module (also the small-input fallback)."""
    x = pred.astype(jnp.float32)
    t = true.astype(jnp.float32)
    loss = jnp.maximum(x, 0.0) - x * t + jnp.log1p(jnp.exp(-jnp.abs(x)))
    a = max(float(auto_iou), 0.2)
    b1 = (t <= a - 0.1).astype(jnp.float32)
    b2 = ((t > a - 0.1) & (t < a)).astype(jnp.float32)
    b3 = (t >= a).astype(jnp.float32)
    w = 1.0 * b1 + math.exp(1.0 - a) * b2 + jnp.exp(-(t - 1.0)) * b3
    wl = loss * w
    return jnp.mean(wl) if reduction == "mean" else jnp.sum(wl)


def slide_loss(pred, true, auto_iou=0.5, reduction="mean",
               min_kernel_elems=MIN_KERNEL_ELEMS):
    """SlideLoss(BCEWithLogitsLoss) forward. pred/true: same-shape float arrays."""
    assert pred.shape == true.shape
    if reduction not in ("mean", "sum"):
        # TODO(synk): reduction='none' would need the full elementwise map as
        # output instead of the accumulator; only mean/sum wired here.
        raise NotImplementedError("reduction='none' not wired in this kernel")

    n_elem = pred.size
    a = max(float(auto_iou), 0.2)
    rows = -(-n_elem // LANES)

    # Small-input fallback: launch/pipeline overhead dominates below ~64K elems.
    if n_elem < min_kernel_elems or rows < CHUNK_ROWS:
        return _slide_loss_reference(pred, true, auto_iou=auto_iou, reduction=reduction)

    num_cores, block_bytes = _chip_config()
    itemsize = pred.dtype.itemsize

    max_tile_rows = max(CHUNK_ROWS,
                        (block_bytes // (LANES * itemsize)) // CHUNK_ROWS * CHUNK_ROWS)
    tile_rows = min(max_tile_rows, (rows // CHUNK_ROWS) * CHUNK_ROWS)
    num_tiles = -(-rows // tile_rows)
    num_shards = num_cores if num_tiles >= num_cores else 1
    tiles_per_shard = -(-num_tiles // num_shards)
    last_block = num_tiles - 1

    pred_flat = pred.reshape(-1)
    true_flat = true.reshape(-1)
    rem = n_elem % LANES
    if rem:
        # Only a <128-element pad so the (rows,128) reshape is legal; padded
        # elements (pred=1e4, true=1.0) contribute exactly 0 to the weighted sum.
        # TODO(synk): this still costs one XLA Pad copy; a fully zero-copy path
        # would need manual DMA from the 1-D HBM ref (memory_space=pl.ANY).
        pad = LANES - rem
        pred_flat = jnp.pad(pred_flat, (0, pad), constant_values=_PAD_PRED)
        true_flat = jnp.pad(true_flat, (0, pad), constant_values=_PAD_TRUE)
    pred2 = pred_flat.reshape(rows, LANES)   # bitcast (no copy) when rem == 0
    true2 = true_flat.reshape(rows, LANES)

    scalars = jnp.array([a, a - 0.1, math.exp(1.0 - a)], dtype=jnp.float32)
    limits = jnp.array([rows], dtype=jnp.int32)

    def in_map(c, i, scal, lim):
        # Clamp fully-out-of-range grid steps (uneven shard split / ragged tail)
        # to the last in-bounds block; the kernel masks them to zero.
        return (jnp.minimum(c * tiles_per_shard + i, last_block), 0)

    partials = pl.pallas_call(
        _slide_loss_kernel,
        out_shape=jax.ShapeDtypeStruct((num_shards, ACC_ROWS, LANES), jnp.float32),
        grid_spec=pltpu.PrefetchScalarGridSpec(
            num_scalar_prefetch=2,
            grid=(num_shards, tiles_per_shard),
            in_specs=[
                pl.BlockSpec((tile_rows, LANES), in_map),
                pl.BlockSpec((tile_rows, LANES), in_map),
            ],
            out_specs=pl.BlockSpec((None, ACC_ROWS, LANES),
                                   lambda c, i, scal, lim: (c, 0, 0)),
        ),
        compiler_params=pltpu.CompilerParams(
            dimension_semantics=("parallel", "arbitrary")),
        cost_estimate=pl.CostEstimate(
            flops=10 * n_elem,
            transcendentals=3 * n_elem,
            bytes_accessed=2 * n_elem * itemsize + num_shards * ACC_ROWS * LANES * 4),
    )(scalars, limits, pred2, true2)

    total = jnp.sum(partials)        # single tiny cross-lane reduce, outside the kernel
    if reduction == "mean":
        return total / n_elem
    return total


if __name__ == "__main__":
    key = jax.random.PRNGKey(0)

    def check(shape, dtype, auto_iou, salt):
        kp, kt = jax.random.split(jax.random.fold_in(key, salt))
        pred = jax.random.normal(kp, shape, dtype=jnp.float32).astype(dtype)
        true = jax.random.uniform(kt, shape, dtype=jnp.float32).astype(dtype)
        out = jax.block_until_ready(slide_loss(pred, true, auto_iou=auto_iou))
        ref = jax.block_until_ready(
            _slide_loss_reference(pred, true, auto_iou=auto_iou))
        assert jnp.allclose(out, ref, rtol=1e-4, atol=1e-6), (shape, dtype, out, ref)

    # Small NCHW shape like the PyTorch module (takes the fused small-input path).
    check((2, 4, 16, 16), jnp.float32, 0.5, 0)
    # Pallas kernel path, lane-aligned N (no pad, bitcast reshape).
    check((2, 4, 128, 128), jnp.float32, 0.5, 1)
    # Kernel path, ragged N % 128 != 0 (tiny pad + in-kernel row mask) and
    # auto_iou below the 0.2 clamp.
    check((3, 5, 77, 59), jnp.float32, 0.1, 2)
    # Kernel path, bf16 inputs (native-dtype HBM reads, in-register widening).
    check((2, 4, 96, 128), jnp.bfloat16, 0.6, 3)

    print("KERNEL_OK")
</pallas_src>

<mosaic_0001>
module attributes {stable_mosaic.version = 11 : i64} {
  func.func @_slide_loss_kernel(%arg0: i32, %arg1: i32, %arg2: memref<3xf32, #tpu.memory_space<smem>>, %arg3: memref<1xi32, #tpu.memory_space<smem>>, %arg4: memref<1024x128xf32, #tpu.memory_space<vmem>>, %arg5: memref<1024x128xf32, #tpu.memory_space<vmem>>, %arg6: memref<1x64x128xf32, #tpu.memory_space<vmem>>) attributes {dimension_semantics = [#tpu.dimension_semantics<parallel>, #tpu.dimension_semantics<arbitrary>], iteration_bounds = array<i64: 1, 1>, scalar_prefetch = 2 : i64, scratch_operands = 0 : i64, tpu.core_type = #tpu.core_type<tc>, window_params = [{transform_indices = @transform_0, window_bounds = array<i64: 1024, 128>}, {transform_indices = @transform_1, window_bounds = array<i64: 1024, 128>}, {transform_indices = @transform_2, window_bounds = array<i64: 1, 64, 128>}]} {
    %c0_i32 = arith.constant 0 : i32
    %0 = arith.cmpi eq, %arg1, %c0_i32 : i32
    %1 = arith.extui %0 : i1 to i32
    %c0_i32_0 = arith.constant 0 : i32
    %2 = arith.cmpi ne, %1, %c0_i32_0 : i32
    scf.if %2 {
      %cst = arith.constant 0.000000e+00 : f32
      %12 = vector.broadcast %cst : f32 to vector<64x128xf32>
      %c0_5 = arith.constant 0 : index
      %c0_6 = arith.constant 0 : index
      %c0_7 = arith.constant 0 : index
      %13 = vector.load %arg6[%c0_5, %c0_6, %c0_7] : memref<1x64x128xf32, #tpu.memory_space<vmem>>, vector<1x64x128xf32>
      %14 = vector.shape_cast %13 : vector<1x64x128xf32> to vector<64x128xf32>
      %15 = vector.shape_cast %12 : vector<64x128xf32> to vector<1x64x128xf32>
      tpu.vector_store %arg6[%c0_5, %c0_6, %c0_7], %15 {strides = array<i32>} : memref<1x64x128xf32, #tpu.memory_space<vmem>>, vector<1x64x128xf32>,
    } else {
    }
    %c0 = arith.constant 0 : index
    %3 = memref.load %arg2[%c0] : memref<3xf32, #tpu.memory_space<smem>>
    %c1 = arith.constant 1 : index
    %4 = memref.load %arg2[%c1] : memref<3xf32, #tpu.memory_space<smem>>
    %c2 = arith.constant 2 : index
    %5 = memref.load %arg2[%c2] : memref<3xf32, #tpu.memory_space<smem>>
    %c0_1 = arith.constant 0 : index
    %6 = memref.load %arg3[%c0_1] : memref<1xi32, #tpu.memory_space<smem>>
    %c1_i32 = arith.constant 1 : i32
    %7 = arith.muli %arg0, %c1_i32 : i32
    %8 = arith.addi %7, %arg1 : i32
    %c1024_i32 = arith.constant 1024 : i32
    %9 = arith.muli %8, %c1024_i32 : i32
    %10 = tpu.iota {dimensions = array<i32: 0>} : vector<512x128xi32>
    %c0_i32_2 = arith.constant 0 : i32
    %c2_i32 = arith.constant 2 : i32
    %11 = arith.addi %c0_i32_2, %c2_i32 : i32
    %c1_i32_3 = arith.constant 1 : i32
    scf.for %arg7 = %c0_i32_2 to %11 step %c1_i32_3  : i32 {
      %c1_i32_5 = arith.constant 1 : i32
      %12 = arith.muli %arg7, %c1_i32_5 : i32
      %c0_i32_6 = arith.constant 0 : i32
      %13 = arith.addi %c0_i32_6, %12 : i32
      %c512_i32 = arith.constant 512 : i32
      %14 = arith.muli %13, %c512_i32 : i32
      %15 = tpu.assume_multiple %14, 512 : i32
      %16 = arith.addi %9, %15 : i32
      %17 = arith.subi %6, %16 : i32
      %c0_i32_7 = arith.constant 0 : i32
      %18 = arith.cmpi sgt, %17, %c0_i32_7 : i32
      %19 = arith.extui %18 : i1 to i32
      %c0_i32_8 = arith.constant 0 : i32
      %20 = arith.cmpi ne, %19, %c0_i32_8 : i32
      scf.if %20 {
        %21 = arith.index_cast %15 : i32 to index
        %c0_9 = arith.constant 0 : index
        %22 = vector.load %arg4[%21, %c0_9] : memref<1024x128xf32, #tpu.memory_space<vmem>>, vector<512x128xf32>
        %23 = arith.index_cast %15 : i32 to index
        %c0_10 = arith.constant 0 : index
        %24 = vector.load %arg5[%23, %c0_10] : memref<1024x128xf32, #tpu.memory_space<vmem>>, vector<512x128xf32>
        %cst = arith.constant 0.000000e+00 : f32
        %25 = vector.broadcast %cst : f32 to vector<512x128xf32>
        %26 = arith.maximumf %22, %25 : vector<512x128xf32>
        %27 = arith.mulf %22, %24 : vector<512x128xf32>
        %28 = arith.subf %26, %27 : vector<512x128xf32>
        %29 = math.absf %22 : vector<512x128xf32>
        %cst_11 = arith.constant 0.000000e+00 : f32
        %30 = vector.broadcast %cst_11 : f32 to vector<512x128xf32>
        %31 = arith.subf %30, %29 : vector<512x128xf32>
        %32 = math.exp %31 : vector<512x128xf32>
        %33 = math.log1p %32 : vector<512x128xf32>
        %34 = arith.addf %28, %33 : vector<512x128xf32>
        %35 = vector.broadcast %3 : f32 to vector<512x128xf32>
        %36 = arith.cmpf oge, %24, %35 : vector<512x128xf32>
        %cst_12 = arith.constant 1.000000e+00 : f32
        %37 = vector.broadcast %cst_12 : f32 to vector<512x128xf32>
        %38 = arith.subf %37, %24 : vector<512x128xf32>
        %39 = math.exp %38 : vector<512x128xf32>
        %40 = vector.broadcast %4 : f32 to vector<512x128xf32>
        %41 = arith.cmpf ogt, %24, %40 : vector<512x128xf32>
        %cst_13 = arith.constant 1.000000e+00 : f32
        %42 = vector.broadcast %5 : f32 to vector<512x128xf32>
        %43 = vector.broadcast %cst_13 : f32 to vector<512x128xf32>
        %44 = arith.select %41, %42, %43 : vector<512x128xi1>, vector<512x128xf32>
        %45 = arith.select %36, %39, %44 : vector<512x128xi1>, vector<512x128xf32>
        %46 = vector.broadcast %17 : i32 to vector<512x128xi32>
        %47 = arith.cmpi slt, %10, %46 : vector<512x128xi32>
        %48 = arith.mulf %34, %45 : vector<512x128xf32>
        %cst_14 = arith.constant 0.000000e+00 : f32
        %49 = vector.broadcast %cst_14 : f32 to vector<512x128xf32>
        %50 = arith.select %47, %48, %49 : vector<512x128xi1>, vector<512x128xf32>
        %c0_15 = arith.constant 0 : index
        %c0_16 = arith.constant 0 : index
        %c0_17 = arith.constant 0 : index
        %51 = vector.load %arg6[%c0_15, %c0_16, %c0_17] : memref<1x64x128xf32, #tpu.memory_space<vmem>>, vector<1x64x128xf32>
        %52 = vector.shape_cast %51 : vector<1x64x128xf32> to vector<64x128xf32>
        %53 = vector.shape_cast %50 : vector<512x128xf32> to vector<8x64x128xf32>
        %cst_18 = arith.constant dense<0.000000e+00> : vector<64x128xf32>
        %54 = vector.multi_reduction <add>, %53, %cst_18 [0] : vector<8x64x128xf32> to vector<64x128xf32>
        %55 = arith.addf %52, %54 : vector<64x128xf32>
        %c0_19 = arith.constant 0 : index
        %c0_20 = arith.constant 0 : index
        %c0_21 = arith.constant 0 : index
        %56 = vector.load %arg6[%c0_19, %c0_20, %c0_21] : memref<1x64x128xf32, #tpu.memory_space<vmem>>, vector<1x64x128xf32>
        %57 = vector.shape_cast %56 : vector<1x64x128xf32> to vector<64x128xf32>
        %58 = vector.shape_cast %55 : vector<64x128xf32> to vector<1x64x128xf32>
        tpu.vector_store %arg6[%c0_19, %c0_20, %c0_21], %58 {strides = array<i32>} : memref<1x64x128xf32, #tpu.memory_space<vmem>>, vector<1x64x128xf32>,
      } else {
      }
    }
    %c2_i32_4 = arith.constant 2 : i32
    return
  }
  func.func @transform_0(%arg0: i32, %arg1: i32, %arg2: memref<3xf32, #tpu.memory_space<smem>>, %arg3: memref<1xi32, #tpu.memory_space<smem>>) -> (i32, i32) {
    %c1_i32 = arith.constant 1 : i32
    %0 = arith.muli %arg0, %c1_i32 : i32
    %1 = arith.addi %0, %arg1 : i32
    %c0_i32 = arith.constant 0 : i32
    %2 = arith.minsi %1, %c0_i32 : i32
    %c0_i32_0 = arith.constant 0 : i32
    %c0_i32_1 = arith.constant 0 : i32
    return %2, %c0_i32_0 : i32, i32
  }
  func.func @transform_1(%arg0: i32, %arg1: i32, %arg2: memref<3xf32, #tpu.memory_space<smem>>, %arg3: memref<1xi32, #tpu.memory_space<smem>>) -> (i32, i32) {
    %c1_i32 = arith.constant 1 : i32
    %0 = arith.muli %arg0, %c1_i32 : i32
    %1 = arith.addi %0, %arg1 : i32
    %c0_i32 = arith.constant 0 : i32
    %2 = arith.minsi %1, %c0_i32 : i32
    %c0_i32_0 = arith.constant 0 : i32
    %c0_i32_1 = arith.constant 0 : i32
    return %2, %c0_i32_0 : i32, i32
  }
  func.func @transform_2(%arg0: i32, %arg1: i32, %arg2: memref<3xf32, #tpu.memory_space<smem>>, %arg3: memref<1xi32, #tpu.memory_space<smem>>) -> (i32, i32, i32) {
    %c0_i32 = arith.constant 0 : i32
    %c0_i32_0 = arith.constant 0 : i32
    %c0_i32_1 = arith.constant 0 : i32
    return %arg0, %c0_i32, %c0_i32_0 : i32, i32, i32
  }
}

</mosaic_0001>

<llo_original>
// kernel: tpu_custom_call.1
$region0: #{tpu_custom_call.1}
  #allocation0 [shape = 'u32[]', space=smem, size = 0x4, offset = 0x4, fixed_abs, tag = 'smem constant byte address 0x4 - core index']
  #allocation1 [shape = 'u32[72,128]{1,0:T(1,128)}', space=vmem, size = 0x9000, scoped, tag = 'internal scratch']
  #allocation2 [shape = 's32[1]{0}', space=sflag, size = 0x4, scoped, tag = 'scoped memory for tpu_custom_call.1']
  #allocation3 [shape = 'u8[512]{0}', space=smem, size = 0x200, scoped, tag = 'prefetched SMEM operand 0']
  #allocation4 [shape = 's32[1]{0:T(128)S(6)}', space=smem, size = 0x200, scoped, tag = 'prefetched SMEM operand 1']
  %s0 = inlined_call_operand.vmem [shape: f32[3], index: 0, kind: input, shape index: {}]
  %s1 = inlined_call_operand.<no memory space> [shape: s32[1], index: 1, kind: input, shape index: {}]
  %s2 = inlined_call_operand.hbm [shape: f32[1024,128], index: 2, kind: input, shape index: {}]
  %s3 = inlined_call_operand.hbm [shape: f32[1024,128], index: 3, kind: input, shape index: {}]
  %s4 = inlined_call_operand.hbm [shape: f32[1,64,128], index: 4, kind: output, shape index: {}]
  %s5 = sld [smem:[#allocation0]]
  $region41: #{tpu_custom_call.1} parent=0
    _
  %s7 = ssub.s32 1, %s5
  %s8 = scalar_select 0, %s7, %s5
  %s10 = sshll.u32 %s0, 4
  %s11 = int_to_ptr.vmem [resolvable:$true] %s10
  %13 = dma.vmem_to_smem %s11, 16, [#allocation3], [#allocation2]
  %14 = sst [smem:[#allocation4]] %s1
  %16 = dma.done [#allocation2], 16
  %17 = sfence
  $region1: #{tpu_custom_call.1} parent=0
    #allocation5 [shape = 'u8[524288]{0}', space=vmem, size = 0x80000, scoped, tag = 'input window, operand 2, single buffered']
    #allocation6 [shape = 's32[1]{0}', space=sflag, size = 0x4, scoped, tag = 'scoped memory for tpu_custom_call.1']
    #allocation7 [shape = 's32[1]{0}', space=sflag, size = 0x4, scoped, tag = 'scoped memory for tpu_custom_call.1']
    #allocation8 [shape = 'u8[524288]{0}', space=vmem, size = 0x80000, scoped, tag = 'input window, operand 3, single buffered']
    #allocation9 [shape = 's32[1]{0}', space=sflag, size = 0x4, scoped, tag = 'scoped memory for tpu_custom_call.1']
    #allocation10 [shape = 'u8[32768]{0}', space=vmem, size = 0x8000, scoped, tag = 'output window, operand 0, single buffered']
    %18 = vsyncpa [#allocation6], 0
    %19 = vsyncpa [#allocation9], 0
    %20 = vsyncpa [#allocation7], 0
    // Predicated region
    $region2: #{tpu_custom_call.1} parent=1 // pred_check
      _
    $region3: #{tpu_custom_call.1} parent=1 // pred_check_branch
      %22 = sbr.rel (0) target = $region5
    $region4: #{tpu_custom_call.1} parent=1 // pred_region
      %s23 = sadd.s32 0, 0
      %p24 = scmp.lt.s32.totalorder %s23, 0
      %s25 = scalar_select %p24, %s23, 0
      %s26 = smul.u32 128, %s25
      %28 = vsyncadd [#allocation6], 0
      %s29 = smul.addr %s26, 8
      %s30 = scalar_lea.hbm %s2, %s29
      %s31 = sshll.u32 %s30, 4
      %s32 = int_to_ptr.hbm [resolvable:$true] %s31
      %s33 = sshll.u32 [#allocation5], 4
      %s34 = int_to_ptr.vmem [resolvable:$true] %s33
      %39 = dma.hbm_to_vmem [thread:$0]  %s32, 16384, %s34, [#allocation6], 128, 128, 8
    $region5: #{tpu_custom_call.1} parent=1 // pred_fallthru
      _
    // Predicated region
    $region6: #{tpu_custom_call.1} parent=1 // pred_check
      _
    $region7: #{tpu_custom_call.1} parent=1 // pred_check_branch
      %41 = sbr.rel (0) target = $region9
    $region8: #{tpu_custom_call.1} parent=1 // pred_region
      %s42 = sadd.s32 0, 0
      %p43 = scmp.lt.s32.totalorder %s42, 0
      %s44 = scalar_select %p43, %s42, 0
      %s45 = smul.u32 128, %s44
      %47 = vsyncadd [#allocation9], 0
      %s48 = smul.addr %s45, 8
      %s49 = scalar_lea.hbm %s3, %s48
      %s50 = sshll.u32 %s49, 4
      %s51 = int_to_ptr.hbm [resolvable:$true] %s50
      %s52 = sshll.u32 [#allocation8], 4
      %s53 = int_to_ptr.vmem [resolvable:$true] %s52
      %58 = dma.hbm_to_vmem [thread:$0]  %s51, 16384, %s53, [#allocation9], 128, 128, 8
    $region9: #{tpu_custom_call.1} parent=1 // pred_fallthru
      _
    // Predicated region
    $region10: #{tpu_custom_call.1} parent=1 // pred_check
      _
    $region11: #{tpu_custom_call.1} parent=1 // pred_check_branch
      %60 = sbr.rel (0) target = $region13
    $region12: #{tpu_custom_call.1} parent=1 // pred_region
      %62 = dma.done [#allocation6], 16384
    $region13: #{tpu_custom_call.1} parent=1 // pred_fallthru
      _
    // Predicated region
    $region14: #{tpu_custom_call.1} parent=1 // pred_check
      _
    $region15: #{tpu_custom_call.1} parent=1 // pred_check_branch
      %64 = sbr.rel (0) target = $region17
    $region16: #{tpu_custom_call.1} parent=1 // pred_region
      %66 = dma.done [#allocation9], 16384
    $region17: #{tpu_custom_call.1} parent=1 // pred_fallthru
      _
    %s67 = sadd.s32 0, 0
    %p68 = scmp.lt.s32.totalorder %s67, 0
    %s69 = scalar_select %p68, %s67, 0
    %s70 = smul.u32 128, %s69
    %s71 = sadd.s32 0, 0
    %p72 = scmp.lt.s32.totalorder %s71, 0
    %s73 = scalar_select %p72, %s71, 0
    %s74 = smul.u32 128, %s73
    %p75 = scmp.eq.s32.totalorder 0, 0
    // Predicated region
    $region18: #{tpu_custom_call.1} parent=1 // pred_check
      %p76 = pneg %p75
    $region19: #{tpu_custom_call.1} parent=1 // pred_check_branch
      %78 = sbr.rel (%p76) target = $region21
    $region20: #{tpu_custom_call.1} parent=1 // pred_region
      %79 = vst [vmem:[#allocation10] sm:$0xff] 0.0
      %80 = vst [vmem:[#allocation10 + $0x8] sm:$0xff] 0.0
      %81 = vst [vmem:[#allocation10 + $0x10] sm:$0xff] 0.0
      %82 = vst [vmem:[#allocation10 + $0x18] sm:$0xff] 0.0
      %83 = vst [vmem:[#allocation10 + $0x20] sm:$0xff] 0.0
      %84 = vst [vmem:[#allocation10 + $0x28] sm:$0xff] 0.0
      %85 = vst [vmem:[#allocation10 + $0x30] sm:$0xff] 0.0
      %86 = vst [vmem:[#allocation10 + $0x38] sm:$0xff] 0.0
    $region21: #{tpu_custom_call.1} parent=1 // pred_fallthru
      _
    %s87 = sld [smem:[#allocation3]]
    %s88 = sld [smem:[#allocation3 + $0x1]]
    %s89 = sld [smem:[#allocation3 + $0x2]]
    %s90 = sld [smem:[#allocation4]]
    %s91 = sadd.s32 0, 0
    %s92 = smul.u32 %s91, 1024
    %v93 = vlaneseq
    %v94 = vshrl.u32 %v93, 7
    %v95 = vadd.s32 %v94, 8
    %v96 = vadd.s32 %v94, 16
    %v97 = vadd.s32 %v94, 24
    %v98 = vadd.s32 %v94, 32
    %v99 = vadd.s32 %v94, 40
    %v100 = vadd.s32 %v94, 48
    %v101 = vadd.s32 %v94, 56
    %v102 = vadd.s32 %v94, 64
    %v103 = vadd.s32 %v94, 72
    %v104 = vadd.s32 %v94, 80
    %v105 = vadd.s32 %v94, 88
    %v106 = vadd.s32 %v94, 96
    %v107 = vadd.s32 %v94, 104
    %v108 = vadd.s32 %v94, 112
    %v109 = vadd.s32 %v94, 120
    %v110 = vadd.s32 %v94, 128
    %v111 = vadd.s32 %v94, 136
    %v112 = vadd.s32 %v94, 144
    %v113 = vadd.s32 %v94, 152
    %v114 = vadd.s32 %v94, 160
    %v115 = vadd.s32 %v94, 168
    %v116 = vadd.s32 %v94, 176
    %v117 = vadd.s32 %v94, 184
    %v118 = vadd.s32 %v94, 192
    %v119 = vadd.s32 %v94, 200
    %v120 = vadd.s32 %v94, 208
    %v121 = vadd.s32 %v94, 216
    %v122 = vadd.s32 %v94, 224
    %v123 = vadd.s32 %v94, 232
    %v124 = vadd.s32 %v94, 240
    %v125 = vadd.s32 %v94, 248
    %v126 = vadd.s32 %v94, 256
    %v127 = vadd.s32 %v94, 264
    %v128 = vadd.s32 %v94, 272
    %v129 = vadd.s32 %v94, 280
    %v130 = vadd.s32 %v94, 288
    %v131 = vadd.s32 %v94, 296
    %v132 = vadd.s32 %v94, 304
    %v133 = vadd.s32 %v94, 312
    %v134 = vadd.s32 %v94, 320
    %v135 = vadd.s32 %v94, 328
    %v136 = vadd.s32 %v94, 336
    %v137 = vadd.s32 %v94, 344
    %v138 = vadd.s32 %v94, 352
    %v139 = vadd.s32 %v94, 360
    %v140 = vadd.s32 %v94, 368
    %v141 = vadd.s32 %v94, 376
    %v142 = vadd.s32 %v94, 384
    %v143 = vadd.s32 %v94, 392
    %v144 = vadd.s32 %v94, 400
    %v145 = vadd.s32 %v94, 408
    %v146 = vadd.s32 %v94, 416
    %v147 = vadd.s32 %v94, 424
    %v148 = vadd.s32 %v94, 432
    %v149 = vadd.s32 %v94, 440
    %v150 = vadd.s32 %v94, 448
    %v151 = vadd.s32 %v94, 456
    %v152 = vadd.s32 %v94, 464
    %v153 = vadd.s32 %v94, 472
    %v154 = vadd.s32 %v94, 480
    %v155 = vadd.s32 %v94, 488
    %v156 = vadd.s32 %v94, 496
    %v157 = vadd.s32 %v94, 504
    loop: start=0, step=1, limit=2
    $region22: #{tpu_custom_call.1} parent=1 // loop_pre_header
      _
    $region23: #{tpu_custom_call.1} parent=1 // loop_header
      %s159 = sphi 0, %s163
      %p160 = scmp.ge.s32.totalorder %s159, 2
    $region24: #{tpu_custom_call.1} parent=1 // loop_header_branch
      %162 = sbr.rel (%p160) target = $region28
    $region25: #{tpu_custom_call.1} parent=1 // loop_body
      %s164 = smul.u32 %s159, 512
      %s165 = sadd.s32 %s92, %s164
      %s166 = ssub.s32 %s90, %s165
      %p167 = scmp.gt.s32.totalorder %s166, 0
      // Predicated region
      $region29: #{tpu_custom_call.1} parent=25 // pred_check
        %p168 = pneg %p167
      $region30: #{tpu_custom_call.1} parent=25 // pred_check_branch
        %170 = sbr.rel (%p168) target = $region32
      $region31: #{tpu_custom_call.1} parent=25 // pred_region
        %s171 = scalar_lea.vmem [#allocation5], %s164
        %v172 = vld [vmem:[%s171] sm:$0xff]
        %v173 = vld [vmem:[%s171 + $0x8] sm:$0xff]
        %v174 = vld [vmem:[%s171 + $0x10] sm:$0xff]
        %v175 = vld [vmem:[%s171 + $0x18] sm:$0xff]
        %v176 = vld [vmem:[%s171 + $0x20] sm:$0xff]
        %v177 = vld [vmem:[%s171 + $0x28] sm:$0xff]
        %v178 = vld [vmem:[%s171 + $0x30] sm:$0xff]
        %v179 = vld [vmem:[%s171 + $0x38] sm:$0xff]
        %v180 = vld [vmem:[%s171 + $0x40] sm:$0xff]
        %v181 = vld [vmem:[%s171 + $0x48] sm:$0xff]
        %v182 = vld [vmem:[%s171 + $0x50] sm:$0xff]
        %v183 = vld [vmem:[%s171 + $0x58] sm:$0xff]
        %v184 = vld [vmem:[%s171 + $0x60] sm:$0xff]
        %v185 = vld [vmem:[%s171 + $0x68] sm:$0xff]
        %v186 = vld [vmem:[%s171 + $0x70] sm:$0xff]
        %v187 = vld [vmem:[%s171 + $0x78] sm:$0xff]
        %v188 = vld [vmem:[%s171 + $0x80] sm:$0xff]
        %v189 = vld [vmem:[%s171 + $0x88] sm:$0xff]
        %v190 = vld [vmem:[%s171 + $0x90] sm:$0xff]
        %v191 = vld [vmem:[%s171 + $0x98] sm:$0xff]
        %v192 = vld [vmem:[%s171 + $0xa0] sm:$0xff]
        %v193 = vld [vmem:[%s171 + $0xa8] sm:$0xff]
        %v194 = vld [vmem:[%s171 + $0xb0] sm:$0xff]
        %v195 = vld [vmem:[%s171 + $0xb8] sm:$0xff]
        %v196 = vld [vmem:[%s171 + $0xc0] sm:$0xff]
        %v197 = vld [vmem:[%s171 + $0xc8] sm:$0xff]
        %v198 = vld [vmem:[%s171 + $0xd0] sm:$0xff]
        %v199 = vld [vmem:[%s171 + $0xd8] sm:$0xff]
        %v200 = vld [vmem:[%s171 + $0xe0] sm:$0xff]
        %v201 = vld [vmem:[%s171 + $0xe8] sm:$0xff]
        %v202 = vld [vmem:[%s171 + $0xf0] sm:$0xff]
        %v203 = vld [vmem:[%s171 + $0xf8] sm:$0xff]
        %v204 = vld [vmem:[%s171 + $0x100] sm:$0xff]
        %v205 = vld [vmem:[%s171 + $0x108] sm:$0xff]
        %v206 = vld [vmem:[%s171 + $0x110] sm:$0xff]
        %v207 = vld [vmem:[%s171 + $0x118] sm:$0xff]
        %v208 = vld [vmem:[%s171 + $0x120] sm:$0xff]
        %v209 = vld [vmem:[%s171 + $0x128] sm:$0xff]
        %v210 = vld [vmem:[%s171 + $0x130] sm:$0xff]
        %v211 = vld [vmem:[%s171 + $0x138] sm:$0xff]
        %v212 = vld [vmem:[%s171 + $0x140] sm:$0xff]
        %v213 = vld [vmem:[%s171 + $0x148] sm:$0xff]
        %v214 = vld [vmem:[%s171 + $0x150] sm:$0xff]
        %v215 = vld [vmem:[%s171 + $0x158] sm:$0xff]
        %v216 = vld [vmem:[%s171 + $0x160] sm:$0xff]
        %v217 = vld [vmem:[%s171 + $0x168] sm:$0xff]
        %v218 = vld [vmem:[%s171 + $0x170] sm:$0xff]
        %v219 = vld [vmem:[%s171 + $0x178] sm:$0xff]
        %v220 = vld [vmem:[%s171 + $0x180] sm:$0xff]
        %v221 = vld [vmem:[%s171 + $0x188] sm:$0xff]
        %v222 = vld [vmem:[%s171 + $0x190] sm:$0xff]
        %v223 = vld [vmem:[%s171 + $0x198] sm:$0xff]
        %v224 = vld [vmem:[%s171 + $0x1a0] sm:$0xff]
        %v225 = vld [vmem:[%s171 + $0x1a8] sm:$0xff]
        %v226 = vld [vmem:[%s171 + $0x1b0] sm:$0xff]
        %v227 = vld [vmem:[%s171 + $0x1b8] sm:$0xff]
        %v228 = vld [vmem:[%s171 + $0x1c0] sm:$0xff]
        %v229 = vld [vmem:[%s171 + $0x1c8] sm:$0xff]
        %v230 = vld [vmem:[%s171 + $0x1d0] sm:$0xff]
        %v231 = vld [vmem:[%s171 + $0x1d8] sm:$0xff]
        %v232 = vld [vmem:[%s171 + $0x1e0] sm:$0xff]
        %v233 = vld [vmem:[%s171 + $0x1e8] sm:$0xff]
        %v234 = vld [vmem:[%s171 + $0x1f0] sm:$0xff]
        %v235 = vld [vmem:[%s171 + $0x1f8] sm:$0xff]
        %s236 = scalar_lea.vmem [#allocation8], %s164
        %v237 = vld [vmem:[%s236] sm:$0xff]
        %v238 = vld [vmem:[%s236 + $0x8] sm:$0xff]
        %v239 = vld [vmem:[%s236 + $0x10] sm:$0xff]
        %v240 = vld [vmem:[%s236 + $0x18] sm:$0xff]
        %v241 = vld [vmem:[%s236 + $0x20] sm:$0xff]
        %v242 = vld [vmem:[%s236 + $0x28] sm:$0xff]
        %v243 = vld [vmem:[%s236 + $0x30] sm:$0xff]
        %v244 = vld [vmem:[%s236 + $0x38] sm:$0xff]
        %v245 = vld [vmem:[%s236 + $0x40] sm:$0xff]
        %v246 = vld [vmem:[%s236 + $0x48] sm:$0xff]
        %v247 = vld [vmem:[%s236 + $0x50] sm:$0xff]
        %v248 = vld [vmem:[%s236 + $0x58] sm:$0xff]
        %v249 = vld [vmem:[%s236 + $0x60] sm:$0xff]
        %v250 = vld [vmem:[%s236 + $0x68] sm:$0xff]
        %v251 = vld [vmem:[%s236 + $0x70] sm:$0xff]
        %v252 = vld [vmem:[%s236 + $0x78] sm:$0xff]
        %v253 = vld [vmem:[%s236 + $0x80] sm:$0xff]
        %v254 = vld [vmem:[%s236 + $0x88] sm:$0xff]
        %v255 = vld [vmem:[%s236 + $0x90] sm:$0xff]
        %v256 = vld [vmem:[%s236 + $0x98] sm:$0xff]
        %v257 = vld [vmem:[%s236 + $0xa0] sm:$0xff]
        %v258 = vld [vmem:[%s236 + $0xa8] sm:$0xff]
        %v259 = vld [vmem:[%s236 + $0xb0] sm:$0xff]
        %v260 = vld [vmem:[%s236 + $0xb8] sm:$0xff]
        %v261 = vld [vmem:[%s236 + $0xc0] sm:$0xff]
        %v262 = vld [vmem:[%s236 + $0xc8] sm:$0xff]
        %v263 = vld [vmem:[%s236 + $0xd0] sm:$0xff]
        %v264 = vld [vmem:[%s236 + $0xd8] sm:$0xff]
        %v265 = vld [vmem:[%s236 + $0xe0] sm:$0xff]
        %v266 = vld [vmem:[%s236 + $0xe8] sm:$0xff]
        %v267 = vld [vmem:[%s236 + $0xf0] sm:$0xff]
        %v268 = vld [vmem:[%s236 + $0xf8] sm:$0xff]
        %v269 = vld [vmem:[%s236 + $0x100] sm:$0xff]
        %v270 = vld [vmem:[%s236 + $0x108] sm:$0xff]
        %v271 = vld [vmem:[%s236 + $0x110] sm:$0xff]
        %v272 = vld [vmem:[%s236 + $0x118] sm:$0xff]
        %v273 = vld [vmem:[%s236 + $0x120] sm:$0xff]
        %v274 = vld [vmem:[%s236 + $0x128] sm:$0xff]
        %v275 = vld [vmem:[%s236 + $0x130] sm:$0xff]
        %v276 = vld [vmem:[%s236 + $0x138] sm:$0xff]
        %v277 = vld [vmem:[%s236 + $0x140] sm:$0xff]
        %v278 = vld [vmem:[%s236 + $0x148] sm:$0xff]
        %v279 = vld [vmem:[%s236 + $0x150] sm:$0xff]
        %v280 = vld [vmem:[%s236 + $0x158] sm:$0xff]
        %v281 = vld [vmem:[%s236 + $0x160] sm:$0xff]
        %v282 = vld [vmem:[%s236 + $0x168] sm:$0xff]
        %v283 = vld [vmem:[%s236 + $0x170] sm:$0xff]
        %v284 = vld [vmem:[%s236 + $0x178] sm:$0xff]
        %v285 = vld [vmem:[%s236 + $0x180] sm:$0xff]
        %v286 = vld [vmem:[%s236 + $0x188] sm:$0xff]
        %v287 = vld [vmem:[%s236 + $0x190] sm:$0xff]
        %v288 = vld [vmem:[%s236 + $0x198] sm:$0xff]
        %v289 = vld [vmem:[%s236 + $0x1a0] sm:$0xff]
        %v290 = vld [vmem:[%s236 + $0x1a8] sm:$0xff]
        %v291 = vld [vmem:[%s236 + $0x1b0] sm:$0xff]
        %v292 = vld [vmem:[%s236 + $0x1b8] sm:$0xff]
        %v293 = vld [vmem:[%s236 + $0x1c0] sm:$0xff]
        %v294 = vld [vmem:[%s236 + $0x1c8] sm:$0xff]
        %v295 = vld [vmem:[%s236 + $0x1d0] sm:$0xff]
        %v296 = vld [vmem:[%s236 + $0x1d8] sm:$0xff]
        %v297 = vld [vmem:[%s236 + $0x1e0] sm:$0xff]
        %v298 = vld [vmem:[%s236 + $0x1e8] sm:$0xff]
        %v299 = vld [vmem:[%s236 + $0x1f0] sm:$0xff]
        %v300 = vld [vmem:[%s236 + $0x1f8] sm:$0xff]
        %v301 = vmax.f32 %v172, 0.0
        %v302 = vmax.f32 %v173, 0.0
        %v303 = vmax.f32 %v174, 0.0
        %v304 = vmax.f32 %v175, 0.0
        %v305 = vmax.f32 %v176, 0.0
        %v306 = vmax.f32 %v177, 0.0
        %v307 = vmax.f32 %v178, 0.0
        %v308 = vmax.f32 %v179, 0.0
        %v309 = vmax.f32 %v180, 0.0
        %v310 = vmax.f32 %v181, 0.0
        %v311 = vmax.f32 %v182, 0.0
        %v312 = vmax.f32 %v183, 0.0
        %v313 = vmax.f32 %v184, 0.0
        %v314 = vmax.f32 %v185, 0.0
        %v315 = vmax.f32 %v186, 0.0
        %v316 = vmax.f32 %v187, 0.0
        %v317 = vmax.f32 %v188, 0.0
        %v318 = vmax.f32 %v189, 0.0
        %v319 = vmax.f32 %v190, 0.0
        %v320 = vmax.f32 %v191, 0.0
        %v321 = vmax.f32 %v192, 0.0
        %v322 = vmax.f32 %v193, 0.0
        %v323 = vmax.f32 %v194, 0.0
        %v324 = vmax.f32 %v195, 0.0
        %v325 = vmax.f32 %v196, 0.0
        %v326 = vmax.f32 %v197, 0.0
        %v327 = vmax.f32 %v198, 0.0
        %v328 = vmax.f32 %v199, 0.0
        %v329 = vmax.f32 %v200, 0.0
        %v330 = vmax.f32 %v201, 0.0
        %v331 = vmax.f32 %v202, 0.0
        %v332 = vmax.f32 %v203, 0.0
        %v333 = vmax.f32 %v204, 0.0
        %v334 = vmax.f32 %v205, 0.0
        %v335 = vmax.f32 %v206, 0.0
        %v336 = vmax.f32 %v207, 0.0
        %v337 = vmax.f32 %v208, 0.0
        %v338 = vmax.f32 %v209, 0.0
        %v339 = vmax.f32 %v210, 0.0
        %v340 = vmax.f32 %v211, 0.0
        %v341 = vmax.f32 %v212, 0.0
        %v342 = vmax.f32 %v213, 0.0
        %v343 = vmax.f32 %v214, 0.0
        %v344 = vmax.f32 %v215, 0.0
        %v345 = vmax.f32 %v216, 0.0
        %v346 = vmax.f32 %v217, 0.0
        %v347 = vmax.f32 %v218, 0.0
        %v348 = vmax.f32 %v219, 0.0
        %v349 = vmax.f32 %v220, 0.0
        %v350 = vmax.f32 %v221, 0.0
        %v351 = vmax.f32 %v222, 0.0
        %v352 = vmax.f32 %v223, 0.0
        %v353 = vmax.f32 %v224, 0.0
        %v354 = vmax.f32 %v225, 0.0
        %v355 = vmax.f32 %v226, 0.0
        %v356 = vmax.f32 %v227, 0.0
        %v357 = vmax.f32 %v228, 0.0
        %v358 = vmax.f32 %v229, 0.0
        %v359 = vmax.f32 %v230, 0.0
        %v360 = vmax.f32 %v231, 0.0
        %v361 = vmax.f32 %v232, 0.0
        %v362 = vmax.f32 %v233, 0.0
        %v363 = vmax.f32 %v234, 0.0
        %v364 = vmax.f32 %v235, 0.0
        %v365 = vmul.f32 %v172, %v237
        %v366 = vmul.f32 %v173, %v238
        %v367 = vmul.f32 %v174, %v239
        %v368 = vmul.f32 %v175, %v240
        %v369 = vmul.f32 %v176, %v241
        %v370 = vmul.f32 %v177, %v242
        %v371 = vmul.f32 %v178, %v243
        %v372 = vmul.f32 %v179, %v244
        %v373 = vmul.f32 %v180, %v245
        %v374 = vmul.f32 %v181, %v246
        %v375 = vmul.f32 %v182, %v247
        %v376 = vmul.f32 %v183, %v248
        %v377 = vmul.f32 %v184, %v249
        %v378 = vmul.f32 %v185, %v250
        %v379 = vmul.f32 %v186, %v251
        %v380 = vmul.f32 %v187, %v252
        %v381 = vmul.f32 %v188, %v253
        %v382 = vmul.f32 %v189, %v254
        %v383 = vmul.f32 %v190, %v255
        %v384 = vmul.f32 %v191, %v256
        %v385 = vmul.f32 %v192, %v257
        %v386 = vmul.f32 %v193, %v258
        %v387 = vmul.f32 %v194, %v259
        %v388 = vmul.f32 %v195, %v260
        %v389 = vmul.f32 %v196, %v261
        %v390 = vmul.f32 %v197, %v262
        %v391 = vmul.f32 %v198, %v263
        %v392 = vmul.f32 %v199, %v264
        %v393 = vmul.f32 %v200, %v265
        %v394 = vmul.f32 %v201, %v266
        %v395 = vmul.f32 %v202, %v267
        %v396 = vmul.f32 %v203, %v268
        %v397 = vmul.f32 %v204, %v269
        %v398 = vmul.f32 %v205, %v270
        %v399 = vmul.f32 %v206, %v271
        %v400 = vmul.f32 %v207, %v272
        %v401 = vmul.f32 %v208, %v273
        %v402 = vmul.f32 %v209, %v274
        %v403 = vmul.f32 %v210, %v275
        %v404 = vmul.f32 %v211, %v276
        %v405 = vmul.f32 %v212, %v277
        %v406 = vmul.f32 %v213, %v278
        %v407 = vmul.f32 %v214, %v279
        %v408 = vmul.f32 %v215, %v280
        %v409 = vmul.f32 %v216, %v281
        %v410 = vmul.f32 %v217, %v282
        %v411 = vmul.f32 %v218, %v283
        %v412 = vmul.f32 %v219, %v284
        %v413 = vmul.f32 %v220, %v285
        %v414 = vmul.f32 %v221, %v286
        %v415 = vmul.f32 %v222, %v287
        %v416 = vmul.f32 %v223, %v288
        %v417 = vmul.f32 %v224, %v289
        %v418 = vmul.f32 %v225, %v290
        %v419 = vmul.f32 %v226, %v291
        %v420 = vmul.f32 %v227, %v292
        %v421 = vmul.f32 %v228, %v293
        %v422 = vmul.f32 %v229, %v294
        %v423 = vmul.f32 %v230, %v295
        %v424 = vmul.f32 %v231, %v296
        %v425 = vmul.f32 %v232, %v297
        %v426 = vmul.f32 %v233, %v298
        %v427 = vmul.f32 %v234, %v299
        %v428 = vmul.f32 %v235, %v300
        %v429 = vsub.f32 %v301, %v365
        %v430 = vsub.f32 %v302, %v366
        %v431 = vsub.f32 %v303, %v367
        %v432 = vsub.f32 %v304, %v368
        %v433 = vsub.f32 %v305, %v369
        %v434 = vsub.f32 %v306, %v370
        %v435 = vsub.f32 %v307, %v371
        %v436 = vsub.f32 %v308, %v372
        %v437 = vsub.f32 %v309, %v373
        %v438 = vsub.f32 %v310, %v374
        %v439 = vsub.f32 %v311, %v375
        %v440 = vsub.f32 %v312, %v376
        %v441 = vsub.f32 %v313, %v377
        %v442 = vsub.f32 %v314, %v378
        %v443 = vsub.f32 %v315, %v379
        %v444 = vsub.f32 %v316, %v380
        %v445 = vsub.f32 %v317, %v381
        %v446 = vsub.f32 %v318, %v382
        %v447 = vsub.f32 %v319, %v383
        %v448 = vsub.f32 %v320, %v384
        %v449 = vsub.f32 %v321, %v385
        %v450 = vsub.f32 %v322, %v386
        %v451 = vsub.f32 %v323, %v387
        %v452 = vsub.f32 %v324, %v388
        %v453 = vsub.f32 %v325, %v389
        %v454 = vsub.f32 %v326, %v390
        %v455 = vsub.f32 %v327, %v391
        %v456 = vsub.f32 %v328, %v392
        %v457 = vsub.f32 %v329, %v393
        %v458 = vsub.f32 %v330, %v394
        %v459 = vsub.f32 %v331, %v395
        %v460 = vsub.f32 %v332, %v396
        %v461 = vsub.f32 %v333, %v397
        %v462 = vsub.f32 %v334, %v398
        %v463 = vsub.f32 %v335, %v399
        %v464 = vsub.f32 %v336, %v400
        %v465 = vsub.f32 %v337, %v401
        %v466 = vsub.f32 %v338, %v402
        %v467 = vsub.f32 %v339, %v403
        %v468 = vsub.f32 %v340, %v404
        %v469 = vsub.f32 %v341, %v405
        %v470 = vsub.f32 %v342, %v406
        %v471 = vsub.f32 %v343, %v407
        %v472 = vsub.f32 %v344, %v408
        %v473 = vsub.f32 %v345, %v409
        %v474 = vsub.f32 %v346, %v410
        %v475 = vsub.f32 %v347, %v411
        %v476 = vsub.f32 %v348, %v412
        %v477 = vsub.f32 %v349, %v413
        %v478 = vsub.f32 %v350, %v414
        %v479 = vsub.f32 %v351, %v415
        %v480 = vsub.f32 %v352, %v416
        %v481 = vsub.f32 %v353, %v417
        %v482 = vsub.f32 %v354, %v418
        %v483 = vsub.f32 %v355, %v419
        %v484 = vsub.f32 %v356, %v420
        %v485 = vsub.f32 %v357, %v421
        %v486 = vsub.f32 %v358, %v422
        %v487 = vsub.f32 %v359, %v423
        %v488 = vsub.f32 %v360, %v424
        %v489 = vsub.f32 %v361, %v425
        %v490 = vsub.f32 %v362, %v426
        %v491 = vsub.f32 %v363, %v427
        %v492 = vsub.f32 %v364, %v428
        %v493 = vand.u32 2147483647, %v172
        %v494 = vand.u32 2147483647, %v173
        %v495 = vand.u32 2147483647, %v174
        %v496 = vand.u32 2147483647, %v175
        %v497 = vand.u32 2147483647, %v176
        %v498 = vand.u32 2147483647, %v177
        %v499 = vand.u32 2147483647, %v178
        %v500 = vand.u32 2147483647, %v179
        %v501 = vand.u32 2147483647, %v180
        %v502 = vand.u32 2147483647, %v181
        %v503 = vand.u32 2147483647, %v182
        %v504 = vand.u32 2147483647, %v183
        %v505 = vand.u32 2147483647, %v184
        %v506 = vand.u32 2147483647, %v185
        %v507 = vand.u32 2147483647, %v186
        %v508 = vand.u32 2147483647, %v187
        %v509 = vand.u32 2147483647, %v188
        %v510 = vand.u32 2147483647, %v189
        %v511 = vand.u32 2147483647, %v190
        %v512 = vand.u32 2147483647, %v191
        %v513 = vand.u32 2147483647, %v192
        %v514 = vand.u32 2147483647, %v193
        %v515 = vand.u32 2147483647, %v194
        %v516 = vand.u32 2147483647, %v195
        %v517 = vand.u32 2147483647, %v196
        %v518 = vand.u32 2147483647, %v197
        %v519 = vand.u32 2147483647, %v198
        %v520 = vand.u32 2147483647, %v199
        %v521 = vand.u32 2147483647, %v200
        %v522 = vand.u32 2147483647, %v201
        %v523 = vand.u32 2147483647, %v202
        %v524 = vand.u32 2147483647, %v203
        %v525 = vand.u32 2147483647, %v204
        %v526 = vand.u32 2147483647, %v205
        %v527 = vand.u32 2147483647, %v206
        %v528 = vand.u32 2147483647, %v207
        %v529 = vand.u32 2147483647, %v208
        %v530 = vand.u32 2147483647, %v209
        %v531 = vand.u32 2147483647, %v210
        %v532 = vand.u32 2147483647, %v211
        %v533 = vand.u32 2147483647, %v212
        %v534 = vand.u32 2147483647, %v213
        %v535 = vand.u32 2147483647, %v214
        %v536 = vand.u32 2147483647, %v215
        %v537 = vand.u32 2147483647, %v216
        %v538 = vand.u32 2147483647, %v217
        %v539 = vand.u32 2147483647, %v218
        %v540 = vand.u32 2147483647, %v219
        %v541 = vand.u32 2147483647, %v220
        %v542 = vand.u32 2147483647, %v221
        %v543 = vand.u32 2147483647, %v222
        %v544 = vand.u32 2147483647, %v223
        %v545 = vand.u32 2147483647, %v224
        %v546 = vand.u32 2147483647, %v225
        %v547 = vand.u32 2147483647, %v226
        %v548 = vand.u32 2147483647, %v227
        %v549 = vand.u32 2147483647, %v228
        %v550 = vand.u32 2147483647, %v229
        %v551 = vand.u32 2147483647, %v230
        %v552 = vand.u32 2147483647, %v231
        %v553 = vand.u32 2147483647, %v232
        %v554 = vand.u32 2147483647, %v233
        %v555 = vand.u32 2147483647, %v234
        %v556 = vand.u32 2147483647, %v235
        %v557 = vsub.f32 0.0, %v493
        %v558 = vsub.f32 0.0, %v494
        %v559 = vsub.f32 0.0, %v495
        %v560 = vsub.f32 0.0, %v496
        %v561 = vsub.f32 0.0, %v497
        %v562 = vsub.f32 0.0, %v498
        %v563 = vsub.f32 0.0, %v499
        %v564 = vsub.f32 0.0, %v500
        %v565 = vsub.f32 0.0, %v501
        %v566 = vsub.f32 0.0, %v502
        %v567 = vsub.f32 0.0, %v503
        %v568 = vsub.f32 0.0, %v504
        %v569 = vsub.f32 0.0, %v505
        %v570 = vsub.f32 0.0, %v506
        %v571 = vsub.f32 0.0, %v507
        %v572 = vsub.f32 0.0, %v508
        %v573 = vsub.f32 0.0, %v509
        %v574 = vsub.f32 0.0, %v510
        %v575 = vsub.f32 0.0, %v511
        %v576 = vsub.f32 0.0, %v512
        %v577 = vsub.f32 0.0, %v513
        %v578 = vsub.f32 0.0, %v514
        %v579 = vsub.f32 0.0, %v515
        %v580 = vsub.f32 0.0, %v516
        %v581 = vsub.f32 0.0, %v517
        %v582 = vsub.f32 0.0, %v518
        %v583 = vsub.f32 0.0, %v519
        %v584 = vsub.f32 0.0, %v520
        %v585 = vsub.f32 0.0, %v521
        %v586 = vsub.f32 0.0, %v522
        %v587 = vsub.f32 0.0, %v523
        %v588 = vsub.f32 0.0, %v524
        %v589 = vsub.f32 0.0, %v525
        %v590 = vsub.f32 0.0, %v526
        %v591 = vsub.f32 0.0, %v527
        %v592 = vsub.f32 0.0, %v528
        %v593 = vsub.f32 0.0, %v529
        %v594 = vsub.f32 0.0, %v530
        %v595 = vsub.f32 0.0, %v531
        %v596 = vsub.f32 0.0, %v532
        %v597 = vsub.f32 0.0, %v533
        %v598 = vsub.f32 0.0, %v534
        %v599 = vsub.f32 0.0, %v535
        %v600 = vsub.f32 0.0, %v536
        %v601 = vsub.f32 0.0, %v537
        %v602 = vsub.f32 0.0, %v538
        %v603 = vsub.f32 0.0, %v539
        %v604 = vsub.f32 0.0, %v540
        %v605 = vsub.f32 0.0, %v541
        %v606 = vsub.f32 0.0, %v542
        %v607 = vsub.f32 0.0, %v543
        %v608 = vsub.f32 0.0, %v544
        %v609 = vsub.f32 0.0, %v545
        %v610 = vsub.f32 0.0, %v546
        %v611 = vsub.f32 0.0, %v547
        %v612 = vsub.f32 0.0, %v548
        %v613 = vsub.f32 0.0, %v549
        %v614 = vsub.f32 0.0, %v550
        %v615 = vsub.f32 0.0, %v551
        %v616 = vsub.f32 0.0, %v552
        %v617 = vsub.f32 0.0, %v553
        %v618 = vsub.f32 0.0, %v554
        %v619 = vsub.f32 0.0, %v555
        %v620 = vsub.f32 0.0, %v556
        %v621 = vmul.f32 %v557, 1.442695
        %v622 = vpow.pop %v621
        %v623 = vmul.f32 %v558, 1.442695
        %v624 = vpow.pop %v623
        %v625 = vmul.f32 %v559, 1.442695
        %v626 = vpow.pop %v625
        %v627 = vmul.f32 %v560, 1.442695
        %v628 = vpow.pop %v627
        %v629 = vmul.f32 %v561, 1.442695
        %v630 = vpow.pop %v629
        %v631 = vmul.f32 %v562, 1.442695
        %v632 = vpow.pop %v631
        %v633 = vmul.f32 %v563, 1.442695
        %v634 = vpow.pop %v633
        %v635 = vmul.f32 %v564, 1.442695
        %v636 = vpow.pop %v635
        %v637 = vmul.f32 %v565, 1.442695
        %v638 = vpow.pop %v637
        %v639 = vmul.f32 %v566, 1.442695
        %v640 = vpow.pop %v639
        %v641 = vmul.f32 %v567, 1.442695
        %v642 = vpow.pop %v641
        %v643 = vmul.f32 %v568, 1.442695
        %v644 = vpow.pop %v643
        %v645 = vmul.f32 %v569, 1.442695
        %v646 = vpow.pop %v645
        %v647 = vmul.f32 %v570, 1.442695
        %v648 = vpow.pop %v647
        %v649 = vmul.f32 %v571, 1.442695
        %v650 = vpow.pop %v649
        %v651 = vmul.f32 %v572, 1.442695
        %v652 = vpow.pop %v651
        %v653 = vmul.f32 %v573, 1.442695
        %v654 = vpow.pop %v653
        %v655 = vmul.f32 %v574, 1.442695
        %v656 = vpow.pop %v655
        %v657 = vmul.f32 %v575, 1.442695
        %v658 = vpow.pop %v657
        %v659 = vmul.f32 %v576, 1.442695
        %v660 = vpow.pop %v659
        %v661 = vmul.f32 %v577, 1.442695
        %v662 = vpow.pop %v661
        %v663 = vmul.f32 %v578, 1.442695
        %v664 = vpow.pop %v663
        %v665 = vmul.f32 %v579, 1.442695
        %v666 = vpow.pop %v665
        %v667 = vmul.f32 %v580, 1.442695
        %v668 = vpow.pop %v667
        %v669 = vmul.f32 %v581, 1.442695
        %v670 = vpow.pop %v669
        %v671 = vmul.f32 %v582, 1.442695
        %v672 = vpow.pop %v671
        %v673 = vmul.f32 %v583, 1.442695
        %v674 = vpow.pop %v673
        %v675 = vmul.f32 %v584, 1.442695
        %v676 = vpow.pop %v675
        %v677 = vmul.f32 %v585, 1.442695
        %v678 = vpow.pop %v677
        %v679 = vmul.f32 %v586, 1.442695
        %v680 = vpow.pop %v679
        %v681 = vmul.f32 %v587, 1.442695
        %v682 = vpow.pop %v681
        %v683 = vmul.f32 %v588, 1.442695
        %v684 = vpow.pop %v683
        %v685 = vmul.f32 %v589, 1.442695
        %v686 = vpow.pop %v685
        %v687 = vmul.f32 %v590, 1.442695
        %v688 = vpow.pop %v687
        %v689 = vmul.f32 %v591, 1.442695
        %v690 = vpow.pop %v689
        %v691 = vmul.f32 %v592, 1.442695
        %v692 = vpow.pop %v691
        %v693 = vmul.f32 %v593, 1.442695
        %v694 = vpow.pop %v693
        %v695 = vmul.f32 %v594, 1.442695
        %v696 = vpow.pop %v695
        %v697 = vmul.f32 %v595, 1.442695
        %v698 = vpow.pop %v697
        %v699 = vmul.f32 %v596, 1.442695
        %v700 = vpow.pop %v699
        %v701 = vmul.f32 %v597, 1.442695
        %v702 = vpow.pop %v701
        %v703 = vmul.f32 %v598, 1.442695
        %v704 = vpow.pop %v703
        %v705 = vmul.f32 %v599, 1.442695
        %v706 = vpow.pop %v705
        %v707 = vmul.f32 %v600, 1.442695
        %v708 = vpow.pop %v707
        %v709 = vmul.f32 %v601, 1.442695
        %v710 = vpow.pop %v709
        %v711 = vmul.f32 %v602, 1.442695
        %v712 = vpow.pop %v711
        %v713 = vmul.f32 %v603, 1.442695
        %v714 = vpow.pop %v713
        %v715 = vmul.f32 %v604, 1.442695
        %v716 = vpow.pop %v715
        %v717 = vmul.f32 %v605, 1.442695
        %v718 = vpow.pop %v717
        %v719 = vmul.f32 %v606, 1.442695
        %v720 = vpow.pop %v719
        %v721 = vmul.f32 %v607, 1.442695
        %v722 = vpow.pop %v721
        %v723 = vmul.f32 %v608, 1.442695
        %v724 = vpow.pop %v723
        %v725 = vmul.f32 %v609, 1.442695
        %v726 = vpow.pop %v725
        %v727 = vmul.f32 %v610, 1.442695
        %v728 = vpow.pop %v727
        %v729 = vmul.f32 %v611, 1.442695
        %v730 = vpow.pop %v729
        %v731 = vmul.f32 %v612, 1.442695
        %v732 = vpow.pop %v731
        %v733 = vmul.f32 %v613, 1.442695
        %v734 = vpow.pop %v733
        %v735 = vmul.f32 %v614, 1.442695
        %v736 = vpow.pop %v735
        %v737 = vmul.f32 %v615, 1.442695
        %v738 = vpow.pop %v737
        %v739 = vmul.f32 %v616, 1.442695
        %v740 = vpow.pop %v739
        %v741 = vmul.f32 %v617, 1.442695
        %v742 = vpow.pop %v741
        %v743 = vmul.f32 %v618, 1.442695
        %v744 = vpow.pop %v743
        %v745 = vmul.f32 %v619, 1.442695
        %v746 = vpow.pop %v745
        %v747 = vmul.f32 %v620, 1.442695
        %v748 = vpow.pop %v747
        %v749 = vadd.f32 %v622, 1.0
        %v750 = vlog2.pop %v749
        %v751 = vmul.f32 %v750, 0.6931472
        %v752 = vmul.f32 -0.5, %v622
        %v753 = vadd.f32 %v752, 1.0
        %v754 = vmul.f32 %v753, %v622
        %v755 = vand.u32 2147483647, %v622
        %vm756 = vcmp.lt.f32.partialorder %v755, 0.0004427343
        %v757 = vsel %vm756, %v754, %v751
        %v758 = vadd.f32 %v624, 1.0
        %v759 = vlog2.pop %v758
        %v760 = vmul.f32 %v759, 0.6931472
        %v761 = vmul.f32 -0.5, %v624
        %v762 = vadd.f32 %v761, 1.0
        %v763 = vmul.f32 %v762, %v624
        %v764 = vand.u32 2147483647, %v624
        %vm765 = vcmp.lt.f32.partialorder %v764, 0.0004427343
        %v766 = vsel %vm765, %v763, %v760
        %v767 = vadd.f32 %v626, 1.0
        %v768 = vlog2.pop %v767
        %v769 = vmul.f32 %v768, 0.6931472
        %v770 = vmul.f32 -0.5, %v626
        %v771 = vadd.f32 %v770, 1.0
        %v772 = vmul.f32 %v771, %v626
        %v773 = vand.u32 2147483647, %v626
        %vm774 = vcmp.lt.f32.partialorder %v773, 0.0004427343
        %v775 = vsel %vm774, %v772, %v769
        %v776 = vadd.f32 %v628, 1.0
        %v777 = vlog2.pop %v776
        %v778 = vmul.f32 %v777, 0.6931472
        %v779 = vmul.f32 -0.5, %v628
        %v780 = vadd.f32 %v779, 1.0
        %v781 = vmul.f32 %v780, %v628
        %v782 = vand.u32 2147483647, %v628
        %vm783 = vcmp.lt.f32.partialorder %v782, 0.0004427343
        %v784 = vsel %vm783, %v781, %v778
        %v785 = vadd.f32 %v630, 1.0
        %v786 = vlog2.pop %v785
        %v787 = vmul.f32 %v786, 0.6931472
        %v788 = vmul.f32 -0.5, %v630
        %v789 = vadd.f32 %v788, 1.0
        %v790 = vmul.f32 %v789, %v630
        %v791 = vand.u32 2147483647, %v630
        %vm792 = vcmp.lt.f32.partialorder %v791, 0.0004427343
        %v793 = vsel %vm792, %v790, %v787
        %v794 = vadd.f32 %v632, 1.0
        %v795 = vlog2.pop %v794
        %v796 = vmul.f32 %v795, 0.6931472
        %v797 = vmul.f32 -0.5, %v632
        %v798 = vadd.f32 %v797, 1.0
        %v799 = vmul.f32 %v798, %v632
        %v800 = vand.u32 2147483647, %v632
        %vm801 = vcmp.lt.f32.partialorder %v800, 0.0004427343
        %v802 = vsel %vm801, %v799, %v796
        %v803 = vadd.f32 %v634, 1.0
        %v804 = vlog2.pop %v803
        %v805 = vmul.f32 %v804, 0.6931472
        %v806 = vmul.f32 -0.5, %v634
        %v807 = vadd.f32 %v806, 1.0
        %v808 = vmul.f32 %v807, %v634
        %v809 = vand.u32 2147483647, %v634
        %vm810 = vcmp.lt.f32.partialorder %v809, 0.0004427343
        %v811 = vsel %vm810, %v808, %v805
        %v812 = vadd.f32 %v636, 1.0
        %v813 = vlog2.pop %v812
        %v814 = vmul.f32 %v813, 0.6931472
        %v815 = vmul.f32 -0.5, %v636
        %v816 = vadd.f32 %v815, 1.0
        %v817 = vmul.f32 %v816, %v636
        %v818 = vand.u32 2147483647, %v636
        %vm819 = vcmp.lt.f32.partialorder %v818, 0.0004427343
        %v820 = vsel %vm819, %v817, %v814
        %v821 = vadd.f32 %v638, 1.0
        %v822 = vlog2.pop %v821
        %v823 = vmul.f32 %v822, 0.6931472
        %v824 = vmul.f32 -0.5, %v638
        %v825 = vadd.f32 %v824, 1.0
        %v826 = vmul.f32 %v825, %v638
        %v827 = vand.u32 2147483647, %v638
        %vm828 = vcmp.lt.f32.partialorder %v827, 0.0004427343
        %v829 = vsel %vm828, %v826, %v823
        %v830 = vadd.f32 %v640, 1.0
        %v831 = vlog2.pop %v830
        %v832 = vmul.f32 %v831, 0.6931472
        %v833 = vmul.f32 -0.5, %v640
        %v834 = vadd.f32 %v833, 1.0
        %v835 = vmul.f32 %v834, %v640
        %v836 = vand.u32 2147483647, %v640
        %vm837 = vcmp.lt.f32.partialorder %v836, 0.0004427343
        %v838 = vsel %vm837, %v835, %v832
        %v839 = vadd.f32 %v642, 1.0
        %v840 = vlog2.pop %v839
        %v841 = vmul.f32 %v840, 0.6931472
        %v842 = vmul.f32 -0.5, %v642
        %v843 = vadd.f32 %v842, 1.0
        %v844 = vmul.f32 %v843, %v642
        %v845 = vand.u32 2147483647, %v642
        %vm846 = vcmp.lt.f32.partialorder %v845, 0.0004427343
        %v847 = vsel %vm846, %v844, %v841
        %v848 = vadd.f32 %v644, 1.0
        %v849 = vlog2.pop %v848
        %v850 = vmul.f32 %v849, 0.6931472
        %v851 = vmul.f32 -0.5, %v644
        %v852 = vadd.f32 %v851, 1.0
        %v853 = vmul.f32 %v852, %v644
        %v854 = vand.u32 2147483647, %v644
        %vm855 = vcmp.lt.f32.partialorder %v854, 0.0004427343
        %v856 = vsel %vm855, %v853, %v850
        %v857 = vadd.f32 %v646, 1.0
        %v858 = vlog2.pop %v857
        %v859 = vmul.f32 %v858, 0.6931472
        %v860 = vmul.f32 -0.5, %v646
        %v861 = vadd.f32 %v860, 1.0
        %v862 = vmul.f32 %v861, %v646
        %v863 = vand.u32 2147483647, %v646
        %vm864 = vcmp.lt.f32.partialorder %v863, 0.0004427343
        %v865 = vsel %vm864, %v862, %v859
        %v866 = vadd.f32 %v648, 1.0
        %v867 = vlog2.pop %v866
        %v868 = vmul.f32 %v867, 0.6931472
        %v869 = vmul.f32 -0.5, %v648
        %v870 = vadd.f32 %v869, 1.0
        %v871 = vmul.f32 %v870, %v648
        %v872 = vand.u32 2147483647, %v648
        %vm873 = vcmp.lt.f32.partialorder %v872, 0.0004427343
        %v874 = vsel %vm873, %v871, %v868
        %v875 = vadd.f32 %v650, 1.0
        %v876 = vlog2.pop %v875
        %v877 = vmul.f32 %v876, 0.6931472
        %v878 = vmul.f32 -0.5, %v650
        %v879 = vadd.f32 %v878, 1.0
        %v880 = vmul.f32 %v879, %v650
        %v881 = vand.u32 2147483647, %v650
        %vm882 = vcmp.lt.f32.partialorder %v881, 0.0004427343
        %v883 = vsel %vm882, %v880, %v877
        %v884 = vadd.f32 %v652, 1.0
        %v885 = vlog2.pop %v884
        %v886 = vmul.f32 %v885, 0.6931472
        %v887 = vmul.f32 -0.5, %v652
        %v888 = vadd.f32 %v887, 1.0
        %v889 = vmul.f32 %v888, %v652
        %v890 = vand.u32 2147483647, %v652
        %vm891 = vcmp.lt.f32.partialorder %v890, 0.0004427343
        %v892 = vsel %vm891, %v889, %v886
        %v893 = vadd.f32 %v654, 1.0
        %v894 = vlog2.pop %v893
        %v895 = vmul.f32 %v894, 0.6931472
        %v896 = vmul.f32 -0.5, %v654
        %v897 = vadd.f32 %v896, 1.0
        %v898 = vmul.f32 %v897, %v654
        %v899 = vand.u32 2147483647, %v654
        %vm900 = vcmp.lt.f32.partialorder %v899, 0.0004427343
        %v901 = vsel %vm900, %v898, %v895
        %v902 = vadd.f32 %v656, 1.0
        %v903 = vlog2.pop %v902
        %v904 = vmul.f32 %v903, 0.6931472
        %v905 = vmul.f32 -0.5, %v656
        %v906 = vadd.f32 %v905, 1.0
        %v907 = vmul.f32 %v906, %v656
        %v908 = vand.u32 2147483647, %v656
        %vm909 = vcmp.lt.f32.partialorder %v908, 0.0004427343
        %v910 = vsel %vm909, %v907, %v904
        %v911 = vadd.f32 %v658, 1.0
        %v912 = vlog2.pop %v911
        %v913 = vmul.f32 %v912, 0.6931472
        %v914 = vmul.f32 -0.5, %v658
        %v915 = vadd.f32 %v914, 1.0
        %v916 = vmul.f32 %v915, %v658
        %v917 = vand.u32 2147483647, %v658
        %vm918 = vcmp.lt.f32.partialorder %v917, 0.0004427343
        %v919 = vsel %vm918, %v916, %v913
        %v920 = vadd.f32 %v660, 1.0
        %v921 = vlog2.pop %v920
        %v922 = vmul.f32 %v921, 0.6931472
        %v923 = vmul.f32 -0.5, %v660
        %v924 = vadd.f32 %v923, 1.0
        %v925 = vmul.f32 %v924, %v660
        %v926 = vand.u32 2147483647, %v660
        %vm927 = vcmp.lt.f32.partialorder %v926, 0.0004427343
        %v928 = vsel %vm927, %v925, %v922
        %v929 = vadd.f32 %v662, 1.0
        %v930 = vlog2.pop %v929
        %v931 = vmul.f32 %v930, 0.6931472
        %v932 = vmul.f32 -0.5, %v662
        %v933 = vadd.f32 %v932, 1.0
        %v934 = vmul.f32 %v933, %v662
        %v935 = vand.u32 2147483647, %v662
        %vm936 = vcmp.lt.f32.partialorder %v935, 0.0004427343
        %v937 = vsel %vm936, %v934, %v931
        %v938 = vadd.f32 %v664, 1.0
        %v939 = vlog2.pop %v938
        %v940 = vmul.f32 %v939, 0.6931472
        %v941 = vmul.f32 -0.5, %v664
        %v942 = vadd.f32 %v941, 1.0
        %v943 = vmul.f32 %v942, %v664
        %v944 = vand.u32 2147483647, %v664
        %vm945 = vcmp.lt.f32.partialorder %v944, 0.0004427343
        %v946 = vsel %vm945, %v943, %v940
        %v947 = vadd.f32 %v666, 1.0
        %v948 = vlog2.pop %v947
        %v949 = vmul.f32 %v948, 0.6931472
        %v950 = vmul.f32 -0.5, %v666
        %v951 = vadd.f32 %v950, 1.0
        %v952 = vmul.f32 %v951, %v666
        %v953 = vand.u32 2147483647, %v666
        %vm954 = vcmp.lt.f32.partialorder %v953, 0.0004427343
        %v955 = vsel %vm954, %v952, %v949
        %v956 = vadd.f32 %v668, 1.0
        %v957 = vlog2.pop %v956
        %v958 = vmul.f32 %v957, 0.6931472
        %v959 = vmul.f32 -0.5, %v668
        %v960 = vadd.f32 %v959, 1.0
        %v961 = vmul.f32 %v960, %v668
        %v962 = vand.u32 2147483647, %v668
        %vm963 = vcmp.lt.f32.partialorder %v962, 0.0004427343
        %v964 = vsel %vm963, %v961, %v958
        %v965 = vadd.f32 %v670, 1.0
        %v966 = vlog2.pop %v965
        %v967 = vmul.f32 %v966, 0.6931472
        %v968 = vmul.f32 -0.5, %v670
        %v969 = vadd.f32 %v968, 1.0
        %v970 = vmul.f32 %v969, %v670
        %v971 = vand.u32 2147483647, %v670
        %vm972 = vcmp.lt.f32.partialorder %v971, 0.0004427343
        %v973 = vsel %vm972, %v970, %v967
        %v974 = vadd.f32 %v672, 1.0
        %v975 = vlog2.pop %v974
        %v976 = vmul.f32 %v975, 0.6931472
        %v977 = vmul.f32 -0.5, %v672
        %v978 = vadd.f32 %v977, 1.0
        %v979 = vmul.f32 %v978, %v672
        %v980 = vand.u32 2147483647, %v672
        %vm981 = vcmp.lt.f32.partialorder %v980, 0.0004427343
        %v982 = vsel %vm981, %v979, %v976
        %v983 = vadd.f32 %v674, 1.0
        %v984 = vlog2.pop %v983
        %v985 = vmul.f32 %v984, 0.6931472
        %v986 = vmul.f32 -0.5, %v674
        %v987 = vadd.f32 %v986, 1.0
        %v988 = vmul.f32 %v987, %v674
        %v989 = vand.u32 2147483647, %v674
        %vm990 = vcmp.lt.f32.partialorder %v989, 0.0004427343
        %v991 = vsel %vm990, %v988, %v985
        %v992 = vadd.f32 %v676, 1.0
        %v993 = vlog2.pop %v992
        %v994 = vmul.f32 %v993, 0.6931472
        %v995 = vmul.f32 -0.5, %v676
        %v996 = vadd.f32 %v995, 1.0
        %v997 = vmul.f32 %v996, %v676
        %v998 = vand.u32 2147483647, %v676
        %vm999 = vcmp.lt.f32.partialorder %v998, 0.0004427343
        %v1000 = vsel %vm999, %v997, %v994
        %v1001 = vadd.f32 %v678, 1.0
        %v1002 = vlog2.pop %v1001
        %v1003 = vmul.f32 %v1002, 0.6931472
        %v1004 = vmul.f32 -0.5, %v678
        %v1005 = vadd.f32 %v1004, 1.0
        %v1006 = vmul.f32 %v1005, %v678
        %v1007 = vand.u32 2147483647, %v678
        %vm1008 = vcmp.lt.f32.partialorder %v1007, 0.0004427343
        %v1009 = vsel %vm1008, %v1006, %v1003
        %v1010 = vadd.f32 %v680, 1.0
        %v1011 = vlog2.pop %v1010
        %v1012 = vmul.f32 %v1011, 0.6931472
        %v1013 = vmul.f32 -0.5, %v680
        %v1014 = vadd.f32 %v1013, 1.0
        %v1015 = vmul.f32 %v1014, %v680
        %v1016 = vand.u32 2147483647, %v680
        %vm1017 = vcmp.lt.f32.partialorder %v1016, 0.0004427343
        %v1018 = vsel %vm1017, %v1015, %v1012
        %v1019 = vadd.f32 %v682, 1.0
        %v1020 = vlog2.pop %v1019
        %v1021 = vmul.f32 %v1020, 0.6931472
        %v1022 = vmul.f32 -0.5, %v682
        %v1023 = vadd.f32 %v1022, 1.0
        %v1024 = vmul.f32 %v1023, %v682
        %v1025 = vand.u32 2147483647, %v682
        %vm1026 = vcmp.lt.f32.partialorder %v1025, 0.0004427343
        %v1027 = vsel %vm1026, %v1024, %v1021
        %v1028 = vadd.f32 %v684, 1.0
        %v1029 = vlog2.pop %v1028
        %v1030 = vmul.f32 %v1029, 0.6931472
        %v1031 = vmul.f32 -0.5, %v684
        %v1032 = vadd.f32 %v1031, 1.0
        %v1033 = vmul.f32 %v1032, %v684
        %v1034 = vand.u32 2147483647, %v684
        %vm1035 = vcmp.lt.f32.partialorder %v1034, 0.0004427343
        %v1036 = vsel %vm1035, %v1033, %v1030
        %v1037 = vadd.f32 %v686, 1.0
        %v1038 = vlog2.pop %v1037
        %v1039 = vmul.f32 %v1038, 0.6931472
        %v1040 = vmul.f32 -0.5, %v686
        %v1041 = vadd.f32 %v1040, 1.0
        %v1042 = vmul.f32 %v1041, %v686
        %v1043 = vand.u32 2147483647, %v686
        %vm1044 = vcmp.lt.f32.partialorder %v1043, 0.0004427343
        %v1045 = vsel %vm1044, %v1042, %v1039
        %v1046 = vadd.f32 %v688, 1.0
        %v1047 = vlog2.pop %v1046
        %v1048 = vmul.f32 %v1047, 0.6931472
        %v1049 = vmul.f32 -0.5, %v688
        %v1050 = vadd.f32 %v1049, 1.0
        %v1051 = vmul.f32 %v1050, %v688
        %v1052 = vand.u32 2147483647, %v688
        %vm1053 = vcmp.lt.f32.partialorder %v1052, 0.0004427343
        %v1054 = vsel %vm1053, %v1051, %v1048
        %v1055 = vadd.f32 %v690, 1.0
        %v1056 = vlog2.pop %v1055
        %v1057 = vmul.f32 %v1056, 0.6931472
        %v1058 = vmul.f32 -0.5, %v690
        %v1059 = vadd.f32 %v1058, 1.0
        %v1060 = vmul.f32 %v1059, %v690
        %v1061 = vand.u32 2147483647, %v690
        %vm1062 = vcmp.lt.f32.partialorder %v1061, 0.0004427343
        %v1063 = vsel %vm1062, %v1060, %v1057
        %v1064 = vadd.f32 %v692, 1.0
        %v1065 = vlog2.pop %v1064
        %v1066 = vmul.f32 %v1065, 0.6931472
        %v1067 = vmul.f32 -0.5, %v692
        %v1068 = vadd.f32 %v1067, 1.0
        %v1069 = vmul.f32 %v1068, %v692
        %v1070 = vand.u32 2147483647, %v692
        %vm1071 = vcmp.lt.f32.partialorder %v1070, 0.0004427343
        %v1072 = vsel %vm1071, %v1069, %v1066
        %v1073 = vadd.f32 %v694, 1.0
        %v1074 = vlog2.pop %v1073
        %v1075 = vmul.f32 %v1074, 0.6931472
        %v1076 = vmul.f32 -0.5, %v694
        %v1077 = vadd.f32 %v1076, 1.0
        %v1078 = vmul.f32 %v1077, %v694
        %v1079 = vand.u32 2147483647, %v694
        %vm1080 = vcmp.lt.f32.partialorder %v1079, 0.0004427343
        %v1081 = vsel %vm1080, %v1078, %v1075
        %v1082 = vadd.f32 %v696, 1.0
        %v1083 = vlog2.pop %v1082
        %v1084 = vmul.f32 %v1083, 0.6931472
        %v1085 = vmul.f32 -0.5, %v696
        %v1086 = vadd.f32 %v1085, 1.0
        %v1087 = vmul.f32 %v1086, %v696
        %v1088 = vand.u32 2147483647, %v696
        %vm1089 = vcmp.lt.f32.partialorder %v1088, 0.0004427343
        %v1090 = vsel %vm1089, %v1087, %v1084
        %v1091 = vadd.f32 %v698, 1.0
        %v1092 = vlog2.pop %v1091
        %v1093 = vmul.f32 %v1092, 0.6931472
        %v1094 = vmul.f32 -0.5, %v698
        %v1095 = vadd.f32 %v1094, 1.0
        %v1096 = vmul.f32 %v1095, %v698
        %v1097 = vand.u32 2147483647, %v698
        %vm1098 = vcmp.lt.f32.partialorder %v1097, 0.0004427343
        %v1099 = vsel %vm1098, %v1096, %v1093
        %v1100 = vadd.f32 %v700, 1.0
        %v1101 = vlog2.pop %v1100
        %v1102 = vmul.f32 %v1101, 0.6931472
        %v1103 = vmul.f32 -0.5, %v700
        %v1104 = vadd.f32 %v1103, 1.0
        %v1105 = vmul.f32 %v1104, %v700
        %v1106 = vand.u32 2147483647, %v700
        %vm1107 = vcmp.lt.f32.partialorder %v1106, 0.0004427343
        %v1108 = vsel %vm1107, %v1105, %v1102
        %v1109 = vadd.f32 %v702, 1.0
        %v1110 = vlog2.pop %v1109
        %v1111 = vmul.f32 %v1110, 0.6931472
        %v1112 = vmul.f32 -0.5, %v702
        %v1113 = vadd.f32 %v1112, 1.0
        %v1114 = vmul.f32 %v1113, %v702
        %v1115 = vand.u32 2147483647, %v702
        %vm1116 = vcmp.lt.f32.partialorder %v1115, 0.0004427343
        %v1117 = vsel %vm1116, %v1114, %v1111
        %v1118 = vadd.f32 %v704, 1.0
        %v1119 = vlog2.pop %v1118
        %v1120 = vmul.f32 %v1119, 0.6931472
        %v1121 = vmul.f32 -0.5, %v704
        %v1122 = vadd.f32 %v1121, 1.0
        %v1123 = vmul.f32 %v1122, %v704
        %v1124 = vand.u32 2147483647, %v704
        %vm1125 = vcmp.lt.f32.partialorder %v1124, 0.0004427343
        %v1126 = vsel %vm1125, %v1123, %v1120
        %v1127 = vadd.f32 %v706, 1.0
        %v1128 = vlog2.pop %v1127
        %v1129 = vmul.f32 %v1128, 0.6931472
        %v1130 = vmul.f32 -0.5, %v706
        %v1131 = vadd.f32 %v1130, 1.0
        %v1132 = vmul.f32 %v1131, %v706
        %v1133 = vand.u32 2147483647, %v706
        %vm1134 = vcmp.lt.f32.partialorder %v1133, 0.0004427343
        %v1135 = vsel %vm1134, %v1132, %v1129
        %v1136 = vadd.f32 %v708, 1.0
        %v1137 = vlog2.pop %v1136
        %v1138 = vmul.f32 %v1137, 0.6931472
        %v1139 = vmul.f32 -0.5, %v708
        %v1140 = vadd.f32 %v1139, 1.0
        %v1141 = vmul.f32 %v1140, %v708
        %v1142 = vand.u32 2147483647, %v708
        %vm1143 = vcmp.lt.f32.partialorder %v1142, 0.0004427343
        %v1144 = vsel %vm1143, %v1141, %v1138
        %v1145 = vadd.f32 %v710, 1.0
        %v1146 = vlog2.pop %v1145
        %v1147 = vmul.f32 %v1146, 0.6931472
        %v1148 = vmul.f32 -0.5, %v710
        %v1149 = vadd.f32 %v1148, 1.0
        %v1150 = vmul.f32 %v1149, %v710
        %v1151 = vand.u32 2147483647, %v710
        %vm1152 = vcmp.lt.f32.partialorder %v1151, 0.0004427343
        %v1153 = vsel %vm1152, %v1150, %v1147
        %v1154 = vadd.f32 %v712, 1.0
        %v1155 = vlog2.pop %v1154
        %v1156 = vmul.f32 %v1155, 0.6931472
        %v1157 = vmul.f32 -0.5, %v712
        %v1158 = vadd.f32 %v1157, 1.0
        %v1159 = vmul.f32 %v1158, %v712
        %v1160 = vand.u32 2147483647, %v712
        %vm1161 = vcmp.lt.f32.partialorder %v1160, 0.0004427343
        %v1162 = vsel %vm1161, %v1159, %v1156
        %v1163 = vadd.f32 %v714, 1.0
        %v1164 = vlog2.pop %v1163
        %v1165 = vmul.f32 %v1164, 0.6931472
        %v1166 = vmul.f32 -0.5, %v714
        %v1167 = vadd.f32 %v1166, 1.0
        %v1168 = vmul.f32 %v1167, %v714
        %v1169 = vand.u32 2147483647, %v714
        %vm1170 = vcmp.lt.f32.partialorder %v1169, 0.0004427343
        %v1171 = vsel %vm1170, %v1168, %v1165
        %v1172 = vadd.f32 %v716, 1.0
        %v1173 = vlog2.pop %v1172
        %v1174 = vmul.f32 %v1173, 0.6931472
        %v1175 = vmul.f32 -0.5, %v716
        %v1176 = vadd.f32 %v1175, 1.0
        %v1177 = vmul.f32 %v1176, %v716
        %v1178 = vand.u32 2147483647, %v716
        %vm1179 = vcmp.lt.f32.partialorder %v1178, 0.0004427343
        %v1180 = vsel %vm1179, %v1177, %v1174
        %v1181 = vadd.f32 %v718, 1.0
        %v1182 = vlog2.pop %v1181
        %v1183 = vmul.f32 %v1182, 0.6931472
        %v1184 = vmul.f32 -0.5, %v718
        %v1185 = vadd.f32 %v1184, 1.0
        %v1186 = vmul.f32 %v1185, %v718
        %v1187 = vand.u32 2147483647, %v718
        %vm1188 = vcmp.lt.f32.partialorder %v1187, 0.0004427343
        %v1189 = vsel %vm1188, %v1186, %v1183
        %v1190 = vadd.f32 %v720, 1.0
        %v1191 = vlog2.pop %v1190
        %v1192 = vmul.f32 %v1191, 0.6931472
        %v1193 = vmul.f32 -0.5, %v720
        %v1194 = vadd.f32 %v1193, 1.0
        %v1195 = vmul.f32 %v1194, %v720
        %v1196 = vand.u32 2147483647, %v720
        %vm1197 = vcmp.lt.f32.partialorder %v1196, 0.0004427343
        %v1198 = vsel %vm1197, %v1195, %v1192
        %v1199 = vadd.f32 %v722, 1.0
        %v1200 = vlog2.pop %v1199
        %v1201 = vmul.f32 %v1200, 0.6931472
        %v1202 = vmul.f32 -0.5, %v722
        %v1203 = vadd.f32 %v1202, 1.0
        %v1204 = vmul.f32 %v1203, %v722
        %v1205 = vand.u32 2147483647, %v722
        %vm1206 = vcmp.lt.f32.partialorder %v1205, 0.0004427343
        %v1207 = vsel %vm1206, %v1204, %v1201
        %v1208 = vadd.f32 %v724, 1.0
        %v1209 = vlog2.pop %v1208
        %v1210 = vmul.f32 %v1209, 0.6931472
        %v1211 = vmul.f32 -0.5, %v724
        %v1212 = vadd.f32 %v1211, 1.0
        %v1213 = vmul.f32 %v1212, %v724
        %v1214 = vand.u32 2147483647, %v724
        %vm1215 = vcmp.lt.f32.partialorder %v1214, 0.0004427343
        %v1216 = vsel %vm1215, %v1213, %v1210
        %v1217 = vadd.f32 %v726, 1.0
        %v1218 = vlog2.pop %v1217
        %v1219 = vmul.f32 %v1218, 0.6931472
        %v1220 = vmul.f32 -0.5, %v726
        %v1221 = vadd.f32 %v1220, 1.0
        %v1222 = vmul.f32 %v1221, %v726
        %v1223 = vand.u32 2147483647, %v726
        %vm1224 = vcmp.lt.f32.partialorder %v1223, 0.0004427343
        %v1225 = vsel %vm1224, %v1222, %v1219
        %v1226 = vadd.f32 %v728, 1.0
        %v1227 = vlog2.pop %v1226
        %v1228 = vmul.f32 %v1227, 0.6931472
        %v1229 = vmul.f32 -0.5, %v728
        %v1230 = vadd.f32 %v1229, 1.0
        %v1231 = vmul.f32 %v1230, %v728
        %v1232 = vand.u32 2147483647, %v728
        %vm1233 = vcmp.lt.f32.partialorder %v1232, 0.0004427343
        %v1234 = vsel %vm1233, %v1231, %v1228
        %v1235 = vadd.f32 %v730, 1.0
        %v1236 = vlog2.pop %v1235
        %v1237 = vmul.f32 %v1236, 0.6931472
        %v1238 = vmul.f32 -0.5, %v730
        %v1239 = vadd.f32 %v1238, 1.0
        %v1240 = vmul.f32 %v1239, %v730
        %v1241 = vand.u32 2147483647, %v730
        %vm1242 = vcmp.lt.f32.partialorder %v1241, 0.0004427343
        %v1243 = vsel %vm1242, %v1240, %v1237
        %v1244 = vadd.f32 %v732, 1.0
        %v1245 = vlog2.pop %v1244
        %v1246 = vmul.f32 %v1245, 0.6931472
        %v1247 = vmul.f32 -0.5, %v732
        %v1248 = vadd.f32 %v1247, 1.0
        %v1249 = vmul.f32 %v1248, %v732
        %v1250 = vand.u32 2147483647, %v732
        %vm1251 = vcmp.lt.f32.partialorder %v1250, 0.0004427343
        %v1252 = vsel %vm1251, %v1249, %v1246
        %v1253 = vadd.f32 %v734, 1.0
        %v1254 = vlog2.pop %v1253
        %v1255 = vmul.f32 %v1254, 0.6931472
        %v1256 = vmul.f32 -0.5, %v734
        %v1257 = vadd.f32 %v1256, 1.0
        %v1258 = vmul.f32 %v1257, %v734
        %v1259 = vand.u32 2147483647, %v734
        %vm1260 = vcmp.lt.f32.partialorder %v1259, 0.0004427343
        %v1261 = vsel %vm1260, %v1258, %v1255
        %v1262 = vadd.f32 %v736, 1.0
        %v1263 = vlog2.pop %v1262
        %v1264 = vmul.f32 %v1263, 0.6931472
        %v1265 = vmul.f32 -0.5, %v736
        %v1266 = vadd.f32 %v1265, 1.0
        %v1267 = vmul.f32 %v1266, %v736
        %v1268 = vand.u32 2147483647, %v736
        %vm1269 = vcmp.lt.f32.partialorder %v1268, 0.0004427343
        %v1270 = vsel %vm1269, %v1267, %v1264
        %v1271 = vadd.f32 %v738, 1.0
        %v1272 = vlog2.pop %v1271
        %v1273 = vmul.f32 %v1272, 0.6931472
        %v1274 = vmul.f32 -0.5, %v738
        %v1275 = vadd.f32 %v1274, 1.0
        %v1276 = vmul.f32 %v1275, %v738
        %v1277 = vand.u32 2147483647, %v738
        %vm1278 = vcmp.lt.f32.partialorder %v1277, 0.0004427343
        %v1279 = vsel %vm1278, %v1276, %v1273
        %v1280 = vadd.f32 %v740, 1.0
        %v1281 = vlog2.pop %v1280
        %v1282 = vmul.f32 %v1281, 0.6931472
        %v1283 = vmul.f32 -0.5, %v740
        %v1284 = vadd.f32 %v1283, 1.0
        %v1285 = vmul.f32 %v1284, %v740
        %v1286 = vand.u32 2147483647, %v740
        %vm1287 = vcmp.lt.f32.partialorder %v1286, 0.0004427343
        %v1288 = vsel %vm1287, %v1285, %v1282
        %v1289 = vadd.f32 %v742, 1.0
        %v1290 = vlog2.pop %v1289
        %v1291 = vmul.f32 %v1290, 0.6931472
        %v1292 = vmul.f32 -0.5, %v742
        %v1293 = vadd.f32 %v1292, 1.0
        %v1294 = vmul.f32 %v1293, %v742
        %v1295 = vand.u32 2147483647, %v742
        %vm1296 = vcmp.lt.f32.partialorder %v1295, 0.0004427343
        %v1297 = vsel %vm1296, %v1294, %v1291
        %v1298 = vadd.f32 %v744, 1.0
        %v1299 = vlog2.pop %v1298
        %v1300 = vmul.f32 %v1299, 0.6931472
        %v1301 = vmul.f32 -0.5, %v744
        %v1302 = vadd.f32 %v1301, 1.0
        %v1303 = vmul.f32 %v1302, %v744
        %v1304 = vand.u32 2147483647, %v744
        %vm1305 = vcmp.lt.f32.partialorder %v1304, 0.0004427343
        %v1306 = vsel %vm1305, %v1303, %v1300
        %v1307 = vadd.f32 %v746, 1.0
        %v1308 = vlog2.pop %v1307
        %v1309 = vmul.f32 %v1308, 0.6931472
        %v1310 = vmul.f32 -0.5, %v746
        %v1311 = vadd.f32 %v1310, 1.0
        %v1312 = vmul.f32 %v1311, %v746
        %v1313 = vand.u32 2147483647, %v746
        %vm1314 = vcmp.lt.f32.partialorder %v1313, 0.0004427343
        %v1315 = vsel %vm1314, %v1312, %v1309
        %v1316 = vadd.f32 %v748, 1.0
        %v1317 = vlog2.pop %v1316
        %v1318 = vmul.f32 %v1317, 0.6931472
        %v1319 = vmul.f32 -0.5, %v748
        %v1320 = vadd.f32 %v1319, 1.0
        %v1321 = vmul.f32 %v1320, %v748
        %v1322 = vand.u32 2147483647, %v748
        %vm1323 = vcmp.lt.f32.partialorder %v1322, 0.0004427343
        %v1324 = vsel %vm1323, %v1321, %v1318
        %v1325 = vadd.f32 %v429, %v757
        %v1326 = vadd.f32 %v430, %v766
        %v1327 = vadd.f32 %v431, %v775
        %v1328 = vadd.f32 %v432, %v784
        %v1329 = vadd.f32 %v433, %v793
        %v1330 = vadd.f32 %v434, %v802
        %v1331 = vadd.f32 %v435, %v811
        %v1332 = vadd.f32 %v436, %v820
        %v1333 = vadd.f32 %v437, %v829
        %v1334 = vadd.f32 %v438, %v838
        %v1335 = vadd.f32 %v439, %v847
        %v1336 = vadd.f32 %v440, %v856
        %v1337 = vadd.f32 %v441, %v865
        %v1338 = vadd.f32 %v442, %v874
        %v1339 = vadd.f32 %v443, %v883
        %v1340 = vadd.f32 %v444, %v892
        %v1341 = vadd.f32 %v445, %v901
        %v1342 = vadd.f32 %v446, %v910
        %v1343 = vadd.f32 %v447, %v919
        %v1344 = vadd.f32 %v448, %v928
        %v1345 = vadd.f32 %v449, %v937
        %v1346 = vadd.f32 %v450, %v946
        %v1347 = vadd.f32 %v451, %v955
        %v1348 = vadd.f32 %v452, %v964
        %v1349 = vadd.f32 %v453, %v973
        %v1350 = vadd.f32 %v454, %v982
        %v1351 = vadd.f32 %v455, %v991
        %v1352 = vadd.f32 %v456, %v1000
        %v1353 = vadd.f32 %v457, %v1009
        %v1354 = vadd.f32 %v458, %v1018
        %v1355 = vadd.f32 %v459, %v1027
        %v1356 = vadd.f32 %v460, %v1036
        %v1357 = vadd.f32 %v461, %v1045
        %v1358 = vadd.f32 %v462, %v1054
        %v1359 = vadd.f32 %v463, %v1063
        %v1360 = vadd.f32 %v464, %v1072
        %v1361 = vadd.f32 %v465, %v1081
        %v1362 = vadd.f32 %v466, %v1090
        %v1363 = vadd.f32 %v467, %v1099
        %v1364 = vadd.f32 %v468, %v1108
        %v1365 = vadd.f32 %v469, %v1117
        %v1366 = vadd.f32 %v470, %v1126
        %v1367 = vadd.f32 %v471, %v1135
        %v1368 = vadd.f32 %v472, %v1144
        %v1369 = vadd.f32 %v473, %v1153
        %v1370 = vadd.f32 %v474, %v1162
        %v1371 = vadd.f32 %v475, %v1171
        %v1372 = vadd.f32 %v476, %v1180
        %v1373 = vadd.f32 %v477, %v1189
        %v1374 = vadd.f32 %v478, %v1198
        %v1375 = vadd.f32 %v479, %v1207
        %v1376 = vadd.f32 %v480, %v1216
        %v1377 = vadd.f32 %v481, %v1225
        %v1378 = vadd.f32 %v482, %v1234
        %v1379 = vadd.f32 %v483, %v1243
        %v1380 = vadd.f32 %v484, %v1252
        %v1381 = vadd.f32 %v485, %v1261
        %v1382 = vadd.f32 %v486, %v1270
        %v1383 = vadd.f32 %v487, %v1279
        %v1384 = vadd.f32 %v488, %v1288
        %v1385 = vadd.f32 %v489, %v1297
        %v1386 = vadd.f32 %v490, %v1306
        %v1387 = vadd.f32 %v491, %v1315
        %v1388 = vadd.f32 %v492, %v1324
        %v1389 = vstv %s87
        %vm1390 = vcmp.ge.f32.partialorder %v237, %v1389
        %vm1391 = vcmp.ge.f32.partialorder %v238, %v1389
        %vm1392 = vcmp.ge.f32.partialorder %v239, %v1389
        %vm1393 = vcmp.ge.f32.partialorder %v240, %v1389
        %vm1394 = vcmp.ge.f32.partialorder %v241, %v1389
        %vm1395 = vcmp.ge.f32.partialorder %v242, %v1389
        %vm1396 = vcmp.ge.f32.partialorder %v243, %v1389
        %vm1397 = vcmp.ge.f32.partialorder %v244, %v1389
        %vm1398 = vcmp.ge.f32.partialorder %v245, %v1389
        %vm1399 = vcmp.ge.f32.partialorder %v246, %v1389
        %vm1400 = vcmp.ge.f32.partialorder %v247, %v1389
        %vm1401 = vcmp.ge.f32.partialorder %v248, %v1389
        %vm1402 = vcmp.ge.f32.partialorder %v249, %v1389
        %vm1403 = vcmp.ge.f32.partialorder %v250, %v1389
        %vm1404 = vcmp.ge.f32.partialorder %v251, %v1389
        %vm1405 = vcmp.ge.f32.partialorder %v252, %v1389
        %vm1406 = vcmp.ge.f32.partialorder %v253, %v1389
        %vm1407 = vcmp.ge.f32.partialorder %v254, %v1389
        %vm1408 = vcmp.ge.f32.partialorder %v255, %v1389
        %vm1409 = vcmp.ge.f32.partialorder %v256, %v1389
        %vm1410 = vcmp.ge.f32.partialorder %v257, %v1389
        %vm1411 = vcmp.ge.f32.partialorder %v258, %v1389
        %vm1412 = vcmp.ge.f32.partialorder %v259, %v1389
        %vm1413 = vcmp.ge.f32.partialorder %v260, %v1389
        %vm1414 = vcmp.ge.f32.partialorder %v261, %v1389
        %vm1415 = vcmp.ge.f32.partialorder %v262, %v1389
        %vm1416 = vcmp.ge.f32.partialorder %v263, %v1389
        %vm1417 = vcmp.ge.f32.partialorder %v264, %v1389
        %vm1418 = vcmp.ge.f32.partialorder %v265, %v1389
        %vm1419 = vcmp.ge.f32.partialorder %v266, %v1389
        %vm1420 = vcmp.ge.f32.partialorder %v267, %v1389
        %vm1421 = vcmp.ge.f32.partialorder %v268, %v1389
        %vm1422 = vcmp.ge.f32.partialorder %v269, %v1389
        %vm1423 = vcmp.ge.f32.partialorder %v270, %v1389
        %vm1424 = vcmp.ge.f32.partialorder %v271, %v1389
        %vm1425 = vcmp.ge.f32.partialorder %v272, %v1389
        %vm1426 = vcmp.ge.f32.partialorder %v273, %v1389
        %vm1427 = vcmp.ge.f32.partialorder %v274, %v1389
        %vm1428 = vcmp.ge.f32.partialorder %v275, %v1389
        %vm1429 = vcmp.ge.f32.partialorder %v276, %v1389
        %vm1430 = vcmp.ge.f32.partialorder %v277, %v1389
        %vm1431 = vcmp.ge.f32.partialorder %v278, %v1389
        %vm1432 = vcmp.ge.f32.partialorder %v279, %v1389
        %vm1433 = vcmp.ge.f32.partialorder %v280, %v1389
        %vm1434 = vcmp.ge.f32.partialorder %v281, %v1389
        %vm1435 = vcmp.ge.f32.partialorder %v282, %v1389
        %vm1436 = vcmp.ge.f32.partialorder %v283, %v1389
        %vm1437 = vcmp.ge.f32.partialorder %v284, %v1389
        %vm1438 = vcmp.ge.f32.partialorder %v285, %v1389
        %vm1439 = vcmp.ge.f32.partialorder %v286, %v1389
        %vm1440 = vcmp.ge.f32.partialorder %v287, %v1389
        %vm1441 = vcmp.ge.f32.partialorder %v288, %v1389
        %vm1442 = vcmp.ge.f32.partialorder %v289, %v1389
        %vm1443 = vcmp.ge.f32.partialorder %v290, %v1389
        %vm1444 = vcmp.ge.f32.partialorder %v291, %v1389
        %vm1445 = vcmp.ge.f32.partialorder %v292, %v1389
        %vm1446 = vcmp.ge.f32.partialorder %v293, %v1389
        %vm1447 = vcmp.ge.f32.partialorder %v294, %v1389
        %vm1448 = vcmp.ge.f32.partialorder %v295, %v1389
        %vm1449 = vcmp.ge.f32.partialorder %v296, %v1389
        %vm1450 = vcmp.ge.f32.partialorder %v297, %v1389
        %vm1451 = vcmp.ge.f32.partialorder %v298, %v1389
        %vm1452 = vcmp.ge.f32.partialorder %v299, %v1389
        %vm1453 = vcmp.ge.f32.partialorder %v300, %v1389
        %v1454 = vsub.f32 1.0, %v237
        %v1455 = vsub.f32 1.0, %v238
        %v1456 = vsub.f32 1.0, %v239
        %v1457 = vsub.f32 1.0, %v240
        %v1458 = vsub.f32 1.0, %v241
        %v1459 = vsub.f32 1.0, %v242
        %v1460 = vsub.f32 1.0, %v243
        %v1461 = vsub.f32 1.0, %v244
        %v1462 = vsub.f32 1.0, %v245
        %v1463 = vsub.f32 1.0, %v246
        %v1464 = vsub.f32 1.0, %v247
        %v1465 = vsub.f32 1.0, %v248
        %v1466 = vsub.f32 1.0, %v249
        %v1467 = vsub.f32 1.0, %v250
        %v1468 = vsub.f32 1.0, %v251
        %v1469 = vsub.f32 1.0, %v252
        %v1470 = vsub.f32 1.0, %v253
        %v1471 = vsub.f32 1.0, %v254
        %v1472 = vsub.f32 1.0, %v255
        %v1473 = vsub.f32 1.0, %v256
        %v1474 = vsub.f32 1.0, %v257
        %v1475 = vsub.f32 1.0, %v258
        %v1476 = vsub.f32 1.0, %v259
        %v1477 = vsub.f32 1.0, %v260
        %v1478 = vsub.f32 1.0, %v261
        %v1479 = vsub.f32 1.0, %v262
        %v1480 = vsub.f32 1.0, %v263
        %v1481 = vsub.f32 1.0, %v264
        %v1482 = vsub.f32 1.0, %v265
        %v1483 = vsub.f32 1.0, %v266
        %v1484 = vsub.f32 1.0, %v267
        %v1485 = vsub.f32 1.0, %v268
        %v1486 = vsub.f32 1.0, %v269
        %v1487 = vsub.f32 1.0, %v270
        %v1488 = vsub.f32 1.0, %v271
        %v1489 = vsub.f32 1.0, %v272
        %v1490 = vsub.f32 1.0, %v273
        %v1491 = vsub.f32 1.0, %v274
        %v1492 = vsub.f32 1.0, %v275
        %v1493 = vsub.f32 1.0, %v276
        %v1494 = vsub.f32 1.0, %v277
        %v1495 = vsub.f32 1.0, %v278
        %v1496 = vsub.f32 1.0, %v279
        %v1497 = vsub.f32 1.0, %v280
        %v1498 = vsub.f32 1.0, %v281
        %v1499 = vsub.f32 1.0, %v282
        %v1500 = vsub.f32 1.0, %v283
        %v1501 = vsub.f32 1.0, %v284
        %v1502 = vsub.f32 1.0, %v285
        %v1503 = vsub.f32 1.0, %v286
        %v1504 = vsub.f32 1.0, %v287
        %v1505 = vsub.f32 1.0, %v288
        %v1506 = vsub.f32 1.0, %v289
        %v1507 = vsub.f32 1.0, %v290
        %v1508 = vsub.f32 1.0, %v291
        %v1509 = vsub.f32 1.0, %v292
        %v1510 = vsub.f32 1.0, %v293
        %v1511 = vsub.f32 1.0, %v294
        %v1512 = vsub.f32 1.0, %v295
        %v1513 = vsub.f32 1.0, %v296
        %v1514 = vsub.f32 1.0, %v297
        %v1515 = vsub.f32 1.0, %v298
        %v1516 = vsub.f32 1.0, %v299
        %v1517 = vsub.f32 1.0, %v300
        %v1518 = vmul.f32 %v1454, 1.442695
        %v1519 = vpow.pop %v1518
        %v1520 = vmul.f32 %v1455, 1.442695
        %v1521 = vpow.pop %v1520
        %v1522 = vmul.f32 %v1456, 1.442695
        %v1523 = vpow.pop %v1522
        %v1524 = vmul.f32 %v1457, 1.442695
        %v1525 = vpow.pop %v1524
        %v1526 = vmul.f32 %v1458, 1.442695
        %v1527 = vpow.pop %v1526
        %v1528 = vmul.f32 %v1459, 1.442695
        %v1529 = vpow.pop %v1528
        %v1530 = vmul.f32 %v1460, 1.442695
        %v1531 = vpow.pop %v1530
        %v1532 = vmul.f32 %v1461, 1.442695
        %v1533 = vpow.pop %v1532
        %v1534 = vmul.f32 %v1462, 1.442695
        %v1535 = vpow.pop %v1534
        %v1536 = vmul.f32 %v1463, 1.442695
        %v1537 = vpow.pop %v1536
        %v1538 = vmul.f32 %v1464, 1.442695
        %v1539 = vpow.pop %v1538
        %v1540 = vmul.f32 %v1465, 1.442695
        %v1541 = vpow.pop %v1540
        %v1542 = vmul.f32 %v1466, 1.442695
        %v1543 = vpow.pop %v1542
        %v1544 = vmul.f32 %v1467, 1.442695
        %v1545 = vpow.pop %v1544
        %v1546 = vmul.f32 %v1468, 1.442695
        %v1547 = vpow.pop %v1546
        %v1548 = vmul.f32 %v1469, 1.442695
        %v1549 = vpow.pop %v1548
        %v1550 = vmul.f32 %v1470, 1.442695
        %v1551 = vpow.pop %v1550
        %v1552 = vmul.f32 %v1471, 1.442695
        %v1553 = vpow.pop %v1552
        %v1554 = vmul.f32 %v1472, 1.442695
        %v1555 = vpow.pop %v1554
        %v1556 = vmul.f32 %v1473, 1.442695
        %v1557 = vpow.pop %v1556
        %v1558 = vmul.f32 %v1474, 1.442695
        %v1559 = vpow.pop %v1558
        %v1560 = vmul.f32 %v1475, 1.442695
        %v1561 = vpow.pop %v1560
        %v1562 = vmul.f32 %v1476, 1.442695
        %v1563 = vpow.pop %v1562
        %v1564 = vmul.f32 %v1477, 1.442695
        %v1565 = vpow.pop %v1564
        %v1566 = vmul.f32 %v1478, 1.442695
        %v1567 = vpow.pop %v1566
        %v1568 = vmul.f32 %v1479, 1.442695
        %v1569 = vpow.pop %v1568
        %v1570 = vmul.f32 %v1480, 1.442695
        %v1571 = vpow.pop %v1570
        %v1572 = vmul.f32 %v1481, 1.442695
        %v1573 = vpow.pop %v1572
        %v1574 = vmul.f32 %v1482, 1.442695
        %v1575 = vpow.pop %v1574
        %v1576 = vmul.f32 %v1483, 1.442695
        %v1577 = vpow.pop %v1576
        %v1578 = vmul.f32 %v1484, 1.442695
        %v1579 = vpow.pop %v1578
        %v1580 = vmul.f32 %v1485, 1.442695
        %v1581 = vpow.pop %v1580
        %v1582 = vmul.f32 %v1486, 1.442695
        %v1583 = vpow.pop %v1582
        %v1584 = vmul.f32 %v1487, 1.442695
        %v1585 = vpow.pop %v1584
        %v1586 = vmul.f32 %v1488, 1.442695
        %v1587 = vpow.pop %v1586
        %v1588 = vmul.f32 %v1489, 1.442695
        %v1589 = vpow.pop %v1588
        %v1590 = vmul.f32 %v1490, 1.442695
        %v1591 = vpow.pop %v1590
        %v1592 = vmul.f32 %v1491, 1.442695
        %v1593 = vpow.pop %v1592
        %v1594 = vmul.f32 %v1492, 1.442695
        %v1595 = vpow.pop %v1594
        %v1596 = vmul.f32 %v1493, 1.442695
        %v1597 = vpow.pop %v1596
        %v1598 = vmul.f32 %v1494, 1.442695
        %v1599 = vpow.pop %v1598
        %v1600 = vmul.f32 %v1495, 1.442695
        %v1601 = vpow.pop %v1600
        %v1602 = vmul.f32 %v1496, 1.442695
        %v1603 = vpow.pop %v1602
        %v1604 = vmul.f32 %v1497, 1.442695
        %v1605 = vpow.pop %v1604
        %v1606 = vmul.f32 %v1498, 1.442695
        %v1607 = vpow.pop %v1606
        %v1608 = vmul.f32 %v1499, 1.442695
        %v1609 = vpow.pop %v1608
        %v1610 = vmul.f32 %v1500, 1.442695
        %v1611 = vpow.pop %v1610
        %v1612 = vmul.f32 %v1501, 1.442695
        %v1613 = vpow.pop %v1612
        %v1614 = vmul.f32 %v1502, 1.442695
        %v1615 = vpow.pop %v1614
        %v1616 = vmul.f32 %v1503, 1.442695
        %v1617 = vpow.pop %v1616
        %v1618 = vmul.f32 %v1504, 1.442695
        %v1619 = vpow.pop %v1618
        %v1620 = vmul.f32 %v1505, 1.442695
        %v1621 = vpow.pop %v1620
        %v1622 = vmul.f32 %v1506, 1.442695
        %v1623 = vpow.pop %v1622
        %v1624 = vmul.f32 %v1507, 1.442695
        %v1625 = vpow.pop %v1624
        %v1626 = vmul.f32 %v1508, 1.442695
        %v1627 = vpow.pop %v1626
        %v1628 = vmul.f32 %v1509, 1.442695
        %v1629 = vpow.pop %v1628
        %v1630 = vmul.f32 %v1510, 1.442695
        %v1631 = vpow.pop %v1630
        %v1632 = vmul.f32 %v1511, 1.442695
        %v1633 = vpow.pop %v1632
        %v1634 = vmul.f32 %v1512, 1.442695
        %v1635 = vpow.pop %v1634
        %v1636 = vmul.f32 %v1513, 1.442695
        %v1637 = vpow.pop %v1636
        %v1638 = vmul.f32 %v1514, 1.442695
        %v1639 = vpow.pop %v1638
        %v1640 = vmul.f32 %v1515, 1.442695
        %v1641 = vpow.pop %v1640
        %v1642 = vmul.f32 %v1516, 1.442695
        %v1643 = vpow.pop %v1642
        %v1644 = vmul.f32 %v1517, 1.442695
        %v1645 = vpow.pop %v1644
        %v1646 = vstv %s88
        %vm1647 = vcmp.gt.f32.partialorder %v237, %v1646
        %vm1648 = vcmp.gt.f32.partialorder %v238, %v1646
        %vm1649 = vcmp.gt.f32.partialorder %v239, %v1646
        %vm1650 = vcmp.gt.f32.partialorder %v240, %v1646
        %vm1651 = vcmp.gt.f32.partialorder %v241, %v1646
        %vm1652 = vcmp.gt.f32.partialorder %v242, %v1646
        %vm1653 = vcmp.gt.f32.partialorder %v243, %v1646
        %vm1654 = vcmp.gt.f32.partialorder %v244, %v1646
        %vm1655 = vcmp.gt.f32.partialorder %v245, %v1646
        %vm1656 = vcmp.gt.f32.partialorder %v246, %v1646
        %vm1657 = vcmp.gt.f32.partialorder %v247, %v1646
        %vm1658 = vcmp.gt.f32.partialorder %v248, %v1646
        %vm1659 = vcmp.gt.f32.partialorder %v249, %v1646
        %vm1660 = vcmp.gt.f32.partialorder %v250, %v1646
        %vm1661 = vcmp.gt.f32.partialorder %v251, %v1646
        %vm1662 = vcmp.gt.f32.partialorder %v252, %v1646
        %vm1663 = vcmp.gt.f32.partialorder %v253, %v1646
        %vm1664 = vcmp.gt.f32.partialorder %v254, %v1646
        %vm1665 = vcmp.gt.f32.partialorder %v255, %v1646
        %vm1666 = vcmp.gt.f32.partialorder %v256, %v1646
        %vm1667 = vcmp.gt.f32.partialorder %v257, %v1646
        %vm1668 = vcmp.gt.f32.partialorder %v258, %v1646
        %vm1669 = vcmp.gt.f32.partialorder %v259, %v1646
        %vm1670 = vcmp.gt.f32.partialorder %v260, %v1646
        %vm1671 = vcmp.gt.f32.partialorder %v261, %v1646
        %vm1672 = vcmp.gt.f32.partialorder %v262, %v1646
        %vm1673 = vcmp.gt.f32.partialorder %v263, %v1646
        %vm1674 = vcmp.gt.f32.partialorder %v264, %v1646
        %vm1675 = vcmp.gt.f32.partialorder %v265, %v1646
        %vm1676 = vcmp.gt.f32.partialorder %v266, %v1646
        %vm1677 = vcmp.gt.f32.partialorder %v267, %v1646
        %vm1678 = vcmp.gt.f32.partialorder %v268, %v1646
        %vm1679 = vcmp.gt.f32.partialorder %v269, %v1646
        %vm1680 = vcmp.gt.f32.partialorder %v270, %v1646
        %vm1681 = vcmp.gt.f32.partialorder %v271, %v1646
        %vm1682 = vcmp.gt.f32.partialorder %v272, %v1646
        %vm1683 = vcmp.gt.f32.partialorder %v273, %v1646
        %vm1684 = vcmp.gt.f32.partialorder %v274, %v1646
        %vm1685 = vcmp.gt.f32.partialorder %v275, %v1646
        %vm1686 = vcmp.gt.f32.partialorder %v276, %v1646
        %vm1687 = vcmp.gt.f32.partialorder %v277, %v1646
        %vm1688 = vcmp.gt.f32.partialorder %v278, %v1646
        %vm1689 = vcmp.gt.f32.partialorder %v279, %v1646
        %vm1690 = vcmp.gt.f32.partialorder %v280, %v1646
        %vm1691 = vcmp.gt.f32.partialorder %v281, %v1646
        %vm1692 = vcmp.gt.f32.partialorder %v282, %v1646
        %vm1693 = vcmp.gt.f32.partialorder %v283, %v1646
        %vm1694 = vcmp.gt.f32.partialorder %v284, %v1646
        %vm1695 = vcmp.gt.f32.partialorder %v285, %v1646
        %vm1696 = vcmp.gt.f32.partialorder %v286, %v1646
        %vm1697 = vcmp.gt.f32.partialorder %v287, %v1646
        %vm1698 = vcmp.gt.f32.partialorder %v288, %v1646
        %vm1699 = vcmp.gt.f32.partialorder %v289, %v1646
        %vm1700 = vcmp.gt.f32.partialorder %v290, %v1646
        %vm1701 = vcmp.gt.f32.partialorder %v291, %v1646
        %vm1702 = vcmp.gt.f32.partialorder %v292, %v1646
        %vm1703 = vcmp.gt.f32.partialorder %v293, %v1646
        %vm1704 = vcmp.gt.f32.partialorder %v294, %v1646
        %vm1705 = vcmp.gt.f32.partialorder %v295, %v1646
        %vm1706 = vcmp.gt.f32.partialorder %v296, %v1646
        %vm1707 = vcmp.gt.f32.partialorder %v297, %v1646
        %vm1708 = vcmp.gt.f32.partialorder %v298, %v1646
        %vm1709 = vcmp.gt.f32.partialorder %v299, %v1646
        %vm1710 = vcmp.gt.f32.partialorder %v300, %v1646
        %v1711 = vstv %s89
        %v1712 = vsel %vm1647, %v1711, 1.0
        %v1713 = vsel %vm1648, %v1711, 1.0
        %v1714 = vsel %vm1649, %v1711, 1.0
        %v1715 = vsel %vm1650, %v1711, 1.0
        %v1716 = vsel %vm1651, %v1711, 1.0
        %v1717 = vsel %vm1652, %v1711, 1.0
        %v1718 = vsel %vm1653, %v1711, 1.0
        %v1719 = vsel %vm1654, %v1711, 1.0
        %v1720 = vsel %vm1655, %v1711, 1.0
        %v1721 = vsel %vm1656, %v1711, 1.0
        %v1722 = vsel %vm1657, %v1711, 1.0
        %v1723 = vsel %vm1658, %v1711, 1.0
        %v1724 = vsel %vm1659, %v1711, 1.0
        %v1725 = vsel %vm1660, %v1711, 1.0
        %v1726 = vsel %vm1661, %v1711, 1.0
        %v1727 = vsel %vm1662, %v1711, 1.0
        %v1728 = vsel %vm1663, %v1711, 1.0
        %v1729 = vsel %vm1664, %v1711, 1.0
        %v1730 = vsel %vm1665, %v1711, 1.0
        %v1731 = vsel %vm1666, %v1711, 1.0
        %v1732 = vsel %vm1667, %v1711, 1.0
        %v1733 = vsel %vm1668, %v1711, 1.0
        %v1734 = vsel %vm1669, %v1711, 1.0
        %v1735 = vsel %vm1670, %v1711, 1.0
        %v1736 = vsel %vm1671, %v1711, 1.0
        %v1737 = vsel %vm1672, %v1711, 1.0
        %v1738 = vsel %vm1673, %v1711, 1.0
        %v1739 = vsel %vm1674, %v1711, 1.0
        %v1740 = vsel %vm1675, %v1711, 1.0
        %v1741 = vsel %vm1676, %v1711, 1.0
        %v1742 = vsel %vm1677, %v1711, 1.0
        %v1743 = vsel %vm1678, %v1711, 1.0
        %v1744 = vsel %vm1679, %v1711, 1.0
        %v1745 = vsel %vm1680, %v1711, 1.0
        %v1746 = vsel %vm1681, %v1711, 1.0
        %v1747 = vsel %vm1682, %v1711, 1.0
        %v1748 = vsel %vm1683, %v1711, 1.0
        %v1749 = vsel %vm1684, %v1711, 1.0
        %v1750 = vsel %vm1685, %v1711, 1.0
        %v1751 = vsel %vm1686, %v1711, 1.0
        %v1752 = vsel %vm1687, %v1711, 1.0
        %v1753 = vsel %vm1688, %v1711, 1.0
        %v1754 = vsel %vm1689, %v1711, 1.0
        %v1755 = vsel %vm1690, %v1711, 1.0
        %v1756 = vsel %vm1691, %v1711, 1.0
        %v1757 = vsel %vm1692, %v1711, 1.0
        %v1758 = vsel %vm1693, %v1711, 1.0
        %v1759 = vsel %vm1694, %v1711, 1.0
        %v1760 = vsel %vm1695, %v1711, 1.0
        %v1761 = vsel %vm1696, %v1711, 1.0
        %v1762 = vsel %vm1697, %v1711, 1.0
        %v1763 = vsel %vm1698, %v1711, 1.0
        %v1764 = vsel %vm1699, %v1711, 1.0
        %v1765 = vsel %vm1700, %v1711, 1.0
        %v1766 = vsel %vm1701, %v1711, 1.0
        %v1767 = vsel %vm1702, %v1711, 1.0
        %v1768 = vsel %vm1703, %v1711, 1.0
        %v1769 = vsel %vm1704, %v1711, 1.0
        %v1770 = vsel %vm1705, %v1711, 1.0
        %v1771 = vsel %vm1706, %v1711, 1.0
        %v1772 = vsel %vm1707, %v1711, 1.0
        %v1773 = vsel %vm1708, %v1711, 1.0
        %v1774 = vsel %vm1709, %v1711, 1.0
        %v1775 = vsel %vm1710, %v1711, 1.0
        %v1776 = vsel %vm1390, %v1519, %v1712
        %v1777 = vsel %vm1391, %v1521, %v1713
        %v1778 = vsel %vm1392, %v1523, %v1714
        %v1779 = vsel %vm1393, %v1525, %v1715
        %v1780 = vsel %vm1394, %v1527, %v1716
        %v1781 = vsel %vm1395, %v1529, %v1717
        %v1782 = vsel %vm1396, %v1531, %v1718
        %v1783 = vsel %vm1397, %v1533, %v1719
        %v1784 = vsel %vm1398, %v1535, %v1720
        %v1785 = vsel %vm1399, %v1537, %v1721
        %v1786 = vsel %vm1400, %v1539, %v1722
        %v1787 = vsel %vm1401, %v1541, %v1723
        %v1788 = vsel %vm1402, %v1543, %v1724
        %v1789 = vsel %vm1403, %v1545, %v1725
        %v1790 = vsel %vm1404, %v1547, %v1726
        %v1791 = vsel %vm1405, %v1549, %v1727
        %v1792 = vsel %vm1406, %v1551, %v1728
        %v1793 = vsel %vm1407, %v1553, %v1729
        %v1794 = vsel %vm1408, %v1555, %v1730
        %v1795 = vsel %vm1409, %v1557, %v1731
        %v1796 = vsel %vm1410, %v1559, %v1732
        %v1797 = vsel %vm1411, %v1561, %v1733
        %v1798 = vsel %vm1412, %v1563, %v1734
        %v1799 = vsel %vm1413, %v1565, %v1735
        %v1800 = vsel %vm1414, %v1567, %v1736
        %v1801 = vsel %vm1415, %v1569, %v1737
        %v1802 = vsel %vm1416, %v1571, %v1738
        %v1803 = vsel %vm1417, %v1573, %v1739
        %v1804 = vsel %vm1418, %v1575, %v1740
        %v1805 = vsel %vm1419, %v1577, %v1741
        %v1806 = vsel %vm1420, %v1579, %v1742
        %v1807 = vsel %vm1421, %v1581, %v1743
        %v1808 = vsel %vm1422, %v1583, %v1744
        %v1809 = vsel %vm1423, %v1585, %v1745
        %v1810 = vsel %vm1424, %v1587, %v1746
        %v1811 = vsel %vm1425, %v1589, %v1747
        %v1812 = vsel %vm1426, %v1591, %v1748
        %v1813 = vsel %vm1427, %v1593, %v1749
        %v1814 = vsel %vm1428, %v1595, %v1750
        %v1815 = vsel %vm1429, %v1597, %v1751
        %v1816 = vsel %vm1430, %v1599, %v1752
        %v1817 = vsel %vm1431, %v1601, %v1753
        %v1818 = vsel %vm1432, %v1603, %v1754
        %v1819 = vsel %vm1433, %v1605, %v1755
        %v1820 = vsel %vm1434, %v1607, %v1756
        %v1821 = vsel %vm1435, %v1609, %v1757
        %v1822 = vsel %vm1436, %v1611, %v1758
        %v1823 = vsel %vm1437, %v1613, %v1759
        %v1824 = vsel %vm1438, %v1615, %v1760
        %v1825 = vsel %vm1439, %v1617, %v1761
        %v1826 = vsel %vm1440, %v1619, %v1762
        %v1827 = vsel %vm1441, %v1621, %v1763
        %v1828 = vsel %vm1442, %v1623, %v1764
        %v1829 = vsel %vm1443, %v1625, %v1765
        %v1830 = vsel %vm1444, %v1627, %v1766
        %v1831 = vsel %vm1445, %v1629, %v1767
        %v1832 = vsel %vm1446, %v1631, %v1768
        %v1833 = vsel %vm1447, %v1633, %v1769
        %v1834 = vsel %vm1448, %v1635, %v1770
        %v1835 = vsel %vm1449, %v1637, %v1771
        %v1836 = vsel %vm1450, %v1639, %v1772
        %v1837 = vsel %vm1451, %v1641, %v1773
        %v1838 = vsel %vm1452, %v1643, %v1774
        %v1839 = vsel %vm1453, %v1645, %v1775
        %v1840 = vstv %s166
        %vm1841 = vcmp.lt.s32.totalorder %v94, %v1840
        %vm1842 = vcmp.lt.s32.totalorder %v95, %v1840
        %vm1843 = vcmp.lt.s32.totalorder %v96, %v1840
        %vm1844 = vcmp.lt.s32.totalorder %v97, %v1840
        %vm1845 = vcmp.lt.s32.totalorder %v98, %v1840
        %vm1846 = vcmp.lt.s32.totalorder %v99, %v1840
        %vm1847 = vcmp.lt.s32.totalorder %v100, %v1840
        %vm1848 = vcmp.lt.s32.totalorder %v101, %v1840
        %vm1849 = vcmp.lt.s32.totalorder %v102, %v1840
        %vm1850 = vcmp.lt.s32.totalorder %v103, %v1840
        %vm1851 = vcmp.lt.s32.totalorder %v104, %v1840
        %vm1852 = vcmp.lt.s32.totalorder %v105, %v1840
        %vm1853 = vcmp.lt.s32.totalorder %v106, %v1840
        %vm1854 = vcmp.lt.s32.totalorder %v107, %v1840
        %vm1855 = vcmp.lt.s32.totalorder %v108, %v1840
        %vm1856 = vcmp.lt.s32.totalorder %v109, %v1840
        %vm1857 = vcmp.lt.s32.totalorder %v110, %v1840
        %vm1858 = vcmp.lt.s32.totalorder %v111, %v1840
        %vm1859 = vcmp.lt.s32.totalorder %v112, %v1840
        %vm1860 = vcmp.lt.s32.totalorder %v113, %v1840
        %vm1861 = vcmp.lt.s32.totalorder %v114, %v1840
        %vm1862 = vcmp.lt.s32.totalorder %v115, %v1840
        %vm1863 = vcmp.lt.s32.totalorder %v116, %v1840
        %vm1864 = vcmp.lt.s32.totalorder %v117, %v1840
        %vm1865 = vcmp.lt.s32.totalorder %v118, %v1840
        %vm1866 = vcmp.lt.s32.totalorder %v119, %v1840
        %vm1867 = vcmp.lt.s32.totalorder %v120, %v1840
        %vm1868 = vcmp.lt.s32.totalorder %v121, %v1840
        %vm1869 = vcmp.lt.s32.totalorder %v122, %v1840
        %vm1870 = vcmp.lt.s32.totalorder %v123, %v1840
        %vm1871 = vcmp.lt.s32.totalorder %v124, %v1840
        %vm1872 = vcmp.lt.s32.totalorder %v125, %v1840
        %vm1873 = vcmp.lt.s32.totalorder %v126, %v1840
        %vm1874 = vcmp.lt.s32.totalorder %v127, %v1840
        %vm1875 = vcmp.lt.s32.totalorder %v128, %v1840
        %vm1876 = vcmp.lt.s32.totalorder %v129, %v1840
        %vm1877 = vcmp.lt.s32.totalorder %v130, %v1840
        %vm1878 = vcmp.lt.s32.totalorder %v131, %v1840
        %vm1879 = vcmp.lt.s32.totalorder %v132, %v1840
        %vm1880 = vcmp.lt.s32.totalorder %v133, %v1840
        %vm1881 = vcmp.lt.s32.totalorder %v134, %v1840
        %vm1882 = vcmp.lt.s32.totalorder %v135, %v1840
        %vm1883 = vcmp.lt.s32.totalorder %v136, %v1840
        %vm1884 = vcmp.lt.s32.totalorder %v137, %v1840
        %vm1885 = vcmp.lt.s32.totalorder %v138, %v1840
        %vm1886 = vcmp.lt.s32.totalorder %v139, %v1840
        %vm1887 = vcmp.lt.s32.totalorder %v140, %v1840
        %vm1888 = vcmp.lt.s32.totalorder %v141, %v1840
        %vm1889 = vcmp.lt.s32.totalorder %v142, %v1840
        %vm1890 = vcmp.lt.s32.totalorder %v143, %v1840
        %vm1891 = vcmp.lt.s32.totalorder %v144, %v1840
        %vm1892 = vcmp.lt.s32.totalorder %v145, %v1840
        %vm1893 = vcmp.lt.s32.totalorder %v146, %v1840
        %vm1894 = vcmp.lt.s32.totalorder %v147, %v1840
        %vm1895 = vcmp.lt.s32.totalorder %v148, %v1840
        %vm1896 = vcmp.lt.s32.totalorder %v149, %v1840
        %vm1897 = vcmp.lt.s32.totalorder %v150, %v1840
        %vm1898 = vcmp.lt.s32.totalorder %v151, %v1840
        %vm1899 = vcmp.lt.s32.totalorder %v152, %v1840
        %vm1900 = vcmp.lt.s32.totalorder %v153, %v1840
        %vm1901 = vcmp.lt.s32.totalorder %v154, %v1840
        %vm1902 = vcmp.lt.s32.totalorder %v155, %v1840
        %vm1903 = vcmp.lt.s32.totalorder %v156, %v1840
        %vm1904 = vcmp.lt.s32.totalorder %v157, %v1840
        %v1905 = vmul.f32 %v1325, %v1776
        %v1906 = vmul.f32 %v1326, %v1777
        %v1907 = vmul.f32 %v1327, %v1778
        %v1908 = vmul.f32 %v1328, %v1779
        %v1909 = vmul.f32 %v1329, %v1780
        %v1910 = vmul.f32 %v1330, %v1781
        %v1911 = vmul.f32 %v1331, %v1782
        %v1912 = vmul.f32 %v1332, %v1783
        %v1913 = vmul.f32 %v1333, %v1784
        %v1914 = vmul.f32 %v1334, %v1785
        %v1915 = vmul.f32 %v1335, %v1786
        %v1916 = vmul.f32 %v1336, %v1787
        %v1917 = vmul.f32 %v1337, %v1788
        %v1918 = vmul.f32 %v1338, %v1789
        %v1919 = vmul.f32 %v1339, %v1790
        %v1920 = vmul.f32 %v1340, %v1791
        %v1921 = vmul.f32 %v1341, %v1792
        %v1922 = vmul.f32 %v1342, %v1793
        %v1923 = vmul.f32 %v1343, %v1794
        %v1924 = vmul.f32 %v1344, %v1795
        %v1925 = vmul.f32 %v1345, %v1796
        %v1926 = vmul.f32 %v1346, %v1797
        %v1927 = vmul.f32 %v1347, %v1798
        %v1928 = vmul.f32 %v1348, %v1799
        %v1929 = vmul.f32 %v1349, %v1800
        %v1930 = vmul.f32 %v1350, %v1801
        %v1931 = vmul.f32 %v1351, %v1802
        %v1932 = vmul.f32 %v1352, %v1803
        %v1933 = vmul.f32 %v1353, %v1804
        %v1934 = vmul.f32 %v1354, %v1805
        %v1935 = vmul.f32 %v1355, %v1806
        %v1936 = vmul.f32 %v1356, %v1807
        %v1937 = vmul.f32 %v1357, %v1808
        %v1938 = vmul.f32 %v1358, %v1809
        %v1939 = vmul.f32 %v1359, %v1810
        %v1940 = vmul.f32 %v1360, %v1811
        %v1941 = vmul.f32 %v1361, %v1812
        %v1942 = vmul.f32 %v1362, %v1813
        %v1943 = vmul.f32 %v1363, %v1814
        %v1944 = vmul.f32 %v1364, %v1815
        %v1945 = vmul.f32 %v1365, %v1816
        %v1946 = vmul.f32 %v1366, %v1817
        %v1947 = vmul.f32 %v1367, %v1818
        %v1948 = vmul.f32 %v1368, %v1819
        %v1949 = vmul.f32 %v1369, %v1820
        %v1950 = vmul.f32 %v1370, %v1821
        %v1951 = vmul.f32 %v1371, %v1822
        %v1952 = vmul.f32 %v1372, %v1823
        %v1953 = vmul.f32 %v1373, %v1824
        %v1954 = vmul.f32 %v1374, %v1825
        %v1955 = vmul.f32 %v1375, %v1826
        %v1956 = vmul.f32 %v1376, %v1827
        %v1957 = vmul.f32 %v1377, %v1828
        %v1958 = vmul.f32 %v1378, %v1829
        %v1959 = vmul.f32 %v1379, %v1830
        %v1960 = vmul.f32 %v1380, %v1831
        %v1961 = vmul.f32 %v1381, %v1832
        %v1962 = vmul.f32 %v1382, %v1833
        %v1963 = vmul.f32 %v1383, %v1834
        %v1964 = vmul.f32 %v1384, %v1835
        %v1965 = vmul.f32 %v1385, %v1836
        %v1966 = vmul.f32 %v1386, %v1837
        %v1967 = vmul.f32 %v1387, %v1838
        %v1968 = vmul.f32 %v1388, %v1839
        %v1969 = vsel %vm1841, %v1905, 0.0
        %v1970 = vsel %vm1842, %v1906, 0.0
        %v1971 = vsel %vm1843, %v1907, 0.0
        %v1972 = vsel %vm1844, %v1908, 0.0
        %v1973 = vsel %vm1845, %v1909, 0.0
        %v1974 = vsel %vm1846, %v1910, 0.0
        %v1975 = vsel %vm1847, %v1911, 0.0
        %v1976 = vsel %vm1848, %v1912, 0.0
        %v1977 = vsel %vm1849, %v1913, 0.0
        %v1978 = vsel %vm1850, %v1914, 0.0
        %v1979 = vsel %vm1851, %v1915, 0.0
        %v1980 = vsel %vm1852, %v1916, 0.0
        %v1981 = vsel %vm1853, %v1917, 0.0
        %v1982 = vsel %vm1854, %v1918, 0.0
        %v1983 = vsel %vm1855, %v1919, 0.0
        %v1984 = vsel %vm1856, %v1920, 0.0
        %v1985 = vsel %vm1857, %v1921, 0.0
        %v1986 = vsel %vm1858, %v1922, 0.0
        %v1987 = vsel %vm1859, %v1923, 0.0
        %v1988 = vsel %vm1860, %v1924, 0.0
        %v1989 = vsel %vm1861, %v1925, 0.0
        %v1990 = vsel %vm1862, %v1926, 0.0
        %v1991 = vsel %vm1863, %v1927, 0.0
        %v1992 = vsel %vm1864, %v1928, 0.0
        %v1993 = vsel %vm1865, %v1929, 0.0
        %v1994 = vsel %vm1866, %v1930, 0.0
        %v1995 = vsel %vm1867, %v1931, 0.0
        %v1996 = vsel %vm1868, %v1932, 0.0
        %v1997 = vsel %vm1869, %v1933, 0.0
        %v1998 = vsel %vm1870, %v1934, 0.0
        %v1999 = vsel %vm1871, %v1935, 0.0
        %v2000 = vsel %vm1872, %v1936, 0.0
        %v2001 = vsel %vm1873, %v1937, 0.0
        %v2002 = vsel %vm1874, %v1938, 0.0
        %v2003 = vsel %vm1875, %v1939, 0.0
        %v2004 = vsel %vm1876, %v1940, 0.0
        %v2005 = vsel %vm1877, %v1941, 0.0
        %v2006 = vsel %vm1878, %v1942, 0.0
        %v2007 = vsel %vm1879, %v1943, 0.0
        %v2008 = vsel %vm1880, %v1944, 0.0
        %v2009 = vsel %vm1881, %v1945, 0.0
        %v2010 = vsel %vm1882, %v1946, 0.0
        %v2011 = vsel %vm1883, %v1947, 0.0
        %v2012 = vsel %vm1884, %v1948, 0.0
        %v2013 = vsel %vm1885, %v1949, 0.0
        %v2014 = vsel %vm1886, %v1950, 0.0
        %v2015 = vsel %vm1887, %v1951, 0.0
        %v2016 = vsel %vm1888, %v1952, 0.0
        %v2017 = vsel %vm1889, %v1953, 0.0
        %v2018 = vsel %vm1890, %v1954, 0.0
        %v2019 = vsel %vm1891, %v1955, 0.0
        %v2020 = vsel %vm1892, %v1956, 0.0
        %v2021 = vsel %vm1893, %v1957, 0.0
        %v2022 = vsel %vm1894, %v1958, 0.0
        %v2023 = vsel %vm1895, %v1959, 0.0
        %v2024 = vsel %vm1896, %v1960, 0.0
        %v2025 = vsel %vm1897, %v1961, 0.0
        %v2026 = vsel %vm1898, %v1962, 0.0
        %v2027 = vsel %vm1899, %v1963, 0.0
        %v2028 = vsel %vm1900, %v1964, 0.0
        %v2029 = vsel %vm1901, %v1965, 0.0
        %v2030 = vsel %vm1902, %v1966, 0.0
        %v2031 = vsel %vm1903, %v1967, 0.0
        %v2032 = vsel %vm1904, %v1968, 0.0
        %v2033 = vld [vmem:[#allocation10] sm:$0xff]
        %v2034 = vld [vmem:[#allocation10 + $0x8] sm:$0xff]
        %v2035 = vld [vmem:[#allocation10 + $0x10] sm:$0xff]
        %v2036 = vld [vmem:[#allocation10 + $0x18] sm:$0xff]
        %v2037 = vld [vmem:[#allocation10 + $0x20] sm:$0xff]
        %v2038 = vld [vmem:[#allocation10 + $0x28] sm:$0xff]
        %v2039 = vld [vmem:[#allocation10 + $0x30] sm:$0xff]
        %v2040 = vld [vmem:[#allocation10 + $0x38] sm:$0xff]
        %v2041 = vadd.f32 %v1969, %v1977
        %v2042 = vadd.f32 %v2041, %v1985
        %v2043 = vadd.f32 %v2042, %v1993
        %v2044 = vadd.f32 %v2043, %v2001
        %v2045 = vadd.f32 %v2044, %v2009
        %v2046 = vadd.f32 %v2045, %v2017
        %v2047 = vadd.f32 %v2046, %v2025
        %v2048 = vadd.f32 %v1970, %v1978
        %v2049 = vadd.f32 %v2048, %v1986
        %v2050 = vadd.f32 %v2049, %v1994
        %v2051 = vadd.f32 %v2050, %v2002
        %v2052 = vadd.f32 %v2051, %v2010
        %v2053 = vadd.f32 %v2052, %v2018
        %v2054 = vadd.f32 %v2053, %v2026
        %v2055 = vadd.f32 %v1971, %v1979
        %v2056 = vadd.f32 %v2055, %v1987
        %v2057 = vadd.f32 %v2056, %v1995
        %v2058 = vadd.f32 %v2057, %v2003
        %v2059 = vadd.f32 %v2058, %v2011
        %v2060 = vadd.f32 %v2059, %v2019
        %v2061 = vadd.f32 %v2060, %v2027
        %v2062 = vadd.f32 %v1972, %v1980
        %v2063 = vadd.f32 %v2062, %v1988
        %v2064 = vadd.f32 %v2063, %v1996
        %v2065 = vadd.f32 %v2064, %v2004
        %v2066 = vadd.f32 %v2065, %v2012
        %v2067 = vadd.f32 %v2066, %v2020
        %v2068 = vadd.f32 %v2067, %v2028
        %v2069 = vadd.f32 %v1973, %v1981
        %v2070 = vadd.f32 %v2069, %v1989
        %v2071 = vadd.f32 %v2070, %v1997
        %v2072 = vadd.f32 %v2071, %v2005
        %v2073 = vadd.f32 %v2072, %v2013
        %v2074 = vadd.f32 %v2073, %v2021
        %v2075 = vadd.f32 %v2074, %v2029
        %v2076 = vadd.f32 %v1974, %v1982
        %v2077 = vadd.f32 %v2076, %v1990
        %v2078 = vadd.f32 %v2077, %v1998
        %v2079 = vadd.f32 %v2078, %v2006
        %v2080 = vadd.f32 %v2079, %v2014
        %v2081 = vadd.f32 %v2080, %v2022
        %v2082 = vadd.f32 %v2081, %v2030
        %v2083 = vadd.f32 %v1975, %v1983
        %v2084 = vadd.f32 %v2083, %v1991
        %v2085 = vadd.f32 %v2084, %v1999
        %v2086 = vadd.f32 %v2085, %v2007
        %v2087 = vadd.f32 %v2086, %v2015
        %v2088 = vadd.f32 %v2087, %v2023
        %v2089 = vadd.f32 %v2088, %v2031
        %v2090 = vadd.f32 %v1976, %v1984
        %v2091 = vadd.f32 %v2090, %v1992
        %v2092 = vadd.f32 %v2091, %v2000
        %v2093 = vadd.f32 %v2092, %v2008
        %v2094 = vadd.f32 %v2093, %v2016
        %v2095 = vadd.f32 %v2094, %v2024
        %v2096 = vadd.f32 %v2095, %v2032
        %v2097 = vadd.f32 %v2033, %v2047
        %v2098 = vadd.f32 %v2034, %v2054
        %v2099 = vadd.f32 %v2035, %v2061
        %v2100 = vadd.f32 %v2036, %v2068
        %v2101 = vadd.f32 %v2037, %v2075
        %v2102 = vadd.f32 %v2038, %v2082
        %v2103 = vadd.f32 %v2039, %v2089
        %v2104 = vadd.f32 %v2040, %v2096
        %2105 = vst [vmem:[#allocation10] sm:$0xff] %v2097
        %2106 = vst [vmem:[#allocation10 + $0x8] sm:$0xff] %v2098
        %2107 = vst [vmem:[#allocation10 + $0x10] sm:$0xff] %v2099
        %2108 = vst [vmem:[#allocation10 + $0x18] sm:$0xff] %v2100
        %2109 = vst [vmem:[#allocation10 + $0x20] sm:$0xff] %v2101
        %2110 = vst [vmem:[#allocation10 + $0x28] sm:$0xff] %v2102
        %2111 = vst [vmem:[#allocation10 + $0x30] sm:$0xff] %v2103
        %2112 = vst [vmem:[#allocation10 + $0x38] sm:$0xff] %v2104
      $region32: #{tpu_custom_call.1} parent=25 // pred_fallthru
        _
    $region26: #{tpu_custom_call.1} parent=1 // loop_footer
      %s163 = sadd.s32 1, %s159
    $region27: #{tpu_custom_call.1} parent=1 // loop_footer_branch
      %158 = sbr.rel target = $region23
    $region28: #{tpu_custom_call.1} parent=1 // loop_exit
      _
    // Predicated region
    $region33: #{tpu_custom_call.1} parent=1 // pred_check
      _
    $region34: #{tpu_custom_call.1} parent=1 // pred_check_branch
      %2114 = sbr.rel (0) target = $region36
    $region35: #{tpu_custom_call.1} parent=1 // pred_region
      %2116 = vsyncadd [#allocation7], 0
      %s2117 = sshll.u32 [#allocation10], 4
      %s2118 = int_to_ptr.vmem [resolvable:$true] %s2117
      %s2119 = sshll.u32 %s4, 4
      %s2120 = int_to_ptr.hbm [resolvable:$true] %s2119
      %2125 = dma.vmem_to_hbm [thread:$0]  %s2118, 1024, %s2120, [#allocation7], 128, 128, 8
    $region36: #{tpu_custom_call.1} parent=1 // pred_fallthru
      _
    // Predicated region
    $region37: #{tpu_custom_call.1} parent=1 // pred_check
      _
    $region38: #{tpu_custom_call.1} parent=1 // pred_check_branch
      %2127 = sbr.rel (0) target = $region40
    $region39: #{tpu_custom_call.1} parent=1 // pred_region
      %2129 = dma.done [#allocation7], 1024
    $region40: #{tpu_custom_call.1} parent=1 // pred_fallthru
      _
    %2130 = vsyncpa [#allocation6], 1
    %2131 = vsyncpa [#allocation9], 1
    %2132 = vsyncpa [#allocation7], 1

</llo_original>
